<compile_context>
chip_gen: v7x
topology: tpu7x:2x2x1
jax: 0.10.0
libtpu: 0.0.40
codegen_flags: <defaults>
</compile_context>

<pallas_src>
import math
from functools import partial

import numpy as np
import jax
import jax.numpy as jnp
from jax import lax
from jax.experimental import pallas as pl
from jax.experimental.pallas import tpu as pltpu

NEG = -1e30  # "minus infinity" that stays finite (no inf-inf NaNs)


def _round_up(x, m):
    return ((x + m - 1) // m) * m


# --------------------------------------------------------------------------- #
# Kernel 1: decoder forward_step for the last position
#   cross-attention of the token query against the encoder outputs + tanh(out-proj)
#   grid = (batch,)  — all beams of a batch share one encoder block (no inflation)
# --------------------------------------------------------------------------- #
def attention_hidden_pallas(q, enc, mask, wo, *, d_real):
    """
    q   : (B, K_pad, D_pad) bf16   query rows (one per beam slot)
    enc : (B, S_pad, D_pad) bf16   encoder outputs
    mask: (B, 1, S_pad)     f32    additive mask (0 valid, -1e9 padded)
    wo  : (D_pad, D_pad)    bf16
    returns h (B, K_pad, D_pad) bf16
    """
    b, kp, dp = q.shape
    sp = enc.shape[1]
    assert kp % 8 == 0 and dp % 128 == 0 and sp % 128 == 0
    inv_sqrt_d = 1.0 / math.sqrt(float(d_real))

    def kernel(q_ref, enc_ref, mask_ref, wo_ref, h_ref):
        qb = q_ref[0]                       # (kp, dp) bf16
        encb = enc_ref[0]                   # (sp, dp) bf16
        scores = lax.dot_general(
            qb, encb, (((1,), (1,)), ((), ())),
            preferred_element_type=jnp.float32) * inv_sqrt_d          # (kp, sp)
        scores = scores + mask_ref[0]                                 # (1, sp) bcast
        m = jnp.max(scores, axis=-1, keepdims=True)
        e = jnp.exp(scores - m)
        denom = jnp.sum(e, axis=-1, keepdims=True)
        attn = e / denom                    # exact division (no approx reciprocal)
        ctx = jnp.dot(attn.astype(encb.dtype), encb,
                      preferred_element_type=jnp.float32)             # (kp, dp)
        h = jnp.tanh(jnp.dot(ctx.astype(wo_ref.dtype), wo_ref[...],
                             preferred_element_type=jnp.float32))     # (kp, dp)
        h_ref[0] = h.astype(h_ref.dtype)

    return pl.pallas_call(
        kernel,
        out_shape=jax.ShapeDtypeStruct((b, kp, dp), jnp.bfloat16),
        grid_spec=pltpu.PrefetchScalarGridSpec(
            num_scalar_prefetch=0,
            grid=(b,),
            in_specs=[
                pl.BlockSpec((1, kp, dp), lambda i: (i, 0, 0)),   # q
                pl.BlockSpec((1, sp, dp), lambda i: (i, 0, 0)),   # enc (shared by beams)
                pl.BlockSpec((1, 1, sp), lambda i: (i, 0, 0)),    # mask
                pl.BlockSpec((dp, dp), lambda i: (0, 0)),         # wo (grid-invariant)
            ],
            out_specs=pl.BlockSpec((1, kp, dp), lambda i: (i, 0, 0)),
        ),
        compiler_params=pltpu.CompilerParams(
            dimension_semantics=("parallel",),
            vmem_limit_bytes=48 * 1024 * 1024),
    )(q, enc, mask, wo)


# --------------------------------------------------------------------------- #
# Kernel 2: classifier matmul (M = B*K_pad rows) + online logsumexp + running top-k
#   grid = (n_split, n_vocab_tiles); wfc is streamed from HBM exactly once per step
#   (the parallel n_split axis lets v7x's 2 TensorCores each sweep half the vocab).
# --------------------------------------------------------------------------- #
def fc_topk_pallas(h, wfc, bfc, *, beam_k, v_tile, n_split):
    """
    h   : (M, D_pad)     bf16   hidden rows (batch folded into M)
    wfc : (D_pad, V_pad) bf16
    bfc : (1, V_pad)     f32    (-1e9 on padded vocab columns)
    returns topv (n_split, M, 128) f32, topi (n_split, M, 128) i32, lse (n_split, M, 1) f32
    (only lanes [0, beam_k) of topv/topi are meaningful, sorted descending)
    """
    m_rows, dp = h.shape
    vp = wfc.shape[1]
    assert m_rows % 8 == 0 and dp % 128 == 0 and v_tile % 128 == 0
    assert vp % (v_tile * n_split) == 0
    assert 1 <= beam_k <= 128
    n_vt = (vp // v_tile) // n_split

    def kernel(h_ref, wfc_ref, bfc_ref, topv_ref, topi_ref, lse_ref,
               m_sc, l_sc, tv_sc, ti_sc):
        p = pl.program_id(0)
        j = pl.program_id(1)

        @pl.when(j == 0)
        def _():
            m_sc[...] = jnp.full(m_sc.shape, NEG, jnp.float32)
            l_sc[...] = jnp.zeros(l_sc.shape, jnp.float32)
            tv_sc[...] = jnp.full(tv_sc.shape, NEG, jnp.float32)
            ti_sc[...] = jnp.zeros(ti_sc.shape, jnp.int32)

        # classifier matmul for ALL batch*beam rows at once (MXU, f32 accumulate)
        logits = (jnp.dot(h_ref[...], wfc_ref[...],
                          preferred_element_type=jnp.float32) + bfc_ref[...])

        # --- online logsumexp over the vocab sweep -----------------------------
        m_prev = m_sc[...]
        m_new = jnp.maximum(m_prev, jnp.max(logits, axis=-1, keepdims=True))
        l_sc[...] = (l_sc[...] * jnp.exp(m_prev - m_new)
                     + jnp.sum(jnp.exp(logits - m_new), axis=-1, keepdims=True))
        m_sc[...] = m_new

        # --- running per-row top-k (values + global vocab ids) ----------------
        col = (lax.broadcasted_iota(jnp.int32, logits.shape, 1)
               + (p * n_vt + j) * v_tile)                 # global vocab column ids
        lane = lax.broadcasted_iota(jnp.int32, tv_sc.shape, 1)
        big = jnp.int32(2 ** 30)

        work = logits
        run_v = tv_sc[...]
        run_i = ti_sc[...]
        new_v = jnp.full(tv_sc.shape, NEG, jnp.float32)
        new_i = jnp.zeros(ti_sc.shape, jnp.int32)
        for t in range(beam_k):                           # static unroll, beam_k tiny
            tile_max = jnp.max(work, axis=-1, keepdims=True)
            run_max = jnp.max(run_v, axis=-1, keepdims=True)
            take_tile = tile_max > run_max                # ties keep earlier winner
            best_v = jnp.maximum(tile_max, run_max)
            tile_arg = jnp.min(jnp.where(work == tile_max, col, big),
                               axis=-1, keepdims=True)
            run_pos = jnp.min(jnp.where(run_v == run_max, lane, big),
                              axis=-1, keepdims=True)
            run_idx = jnp.sum(jnp.where(lane == run_pos, run_i, 0),
                              axis=-1, keepdims=True)
            best_i = jnp.where(take_tile, tile_arg, run_idx)
            new_v = jnp.where(lane == t, best_v, new_v)
            new_i = jnp.where(lane == t, best_i, new_i)
            work = jnp.where(jnp.logical_and(take_tile, col == tile_arg), NEG, work)
            run_v = jnp.where(jnp.logical_and(jnp.logical_not(take_tile),
                                              lane == run_pos), NEG, run_v)
        tv_sc[...] = new_v
        ti_sc[...] = new_i

        @pl.when(j == pl.num_programs(1) - 1)
        def _():
            topv_ref[0] = tv_sc[...]
            topi_ref[0] = ti_sc[...]
            lse_ref[0] = m_sc[...] + jnp.log(l_sc[...])

    return pl.pallas_call(
        kernel,
        out_shape=(jax.ShapeDtypeStruct((n_split, m_rows, 128), jnp.float32),
                   jax.ShapeDtypeStruct((n_split, m_rows, 128), jnp.int32),
                   jax.ShapeDtypeStruct((n_split, m_rows, 1), jnp.float32)),
        grid_spec=pltpu.PrefetchScalarGridSpec(
            num_scalar_prefetch=0,
            grid=(n_split, n_vt),                         # vocab (reduction) axis last
            in_specs=[
                pl.BlockSpec((m_rows, dp), lambda p, j: (0, 0)),          # h resident
                pl.BlockSpec((dp, v_tile), lambda p, j: (0, p * n_vt + j)),  # wfc stream
                pl.BlockSpec((1, v_tile), lambda p, j: (0, p * n_vt + j)),   # bfc stream
            ],
            out_specs=[
                pl.BlockSpec((1, m_rows, 128), lambda p, j: (p, 0, 0)),
                pl.BlockSpec((1, m_rows, 128), lambda p, j: (p, 0, 0)),
                pl.BlockSpec((1, m_rows, 1), lambda p, j: (p, 0, 0)),
            ],
            scratch_shapes=[
                pltpu.VMEM((m_rows, 1), jnp.float32),     # running max
                pltpu.VMEM((m_rows, 1), jnp.float32),     # running sum
                pltpu.VMEM((m_rows, 128), jnp.float32),   # running top-k values
                pltpu.VMEM((m_rows, 128), jnp.int32),     # running top-k vocab ids
            ]),
        compiler_params=pltpu.CompilerParams(
            dimension_semantics=("parallel", "arbitrary"),
            vmem_limit_bytes=48 * 1024 * 1024),           # within v7x's 64 MiB/TC budget
    )(h, wfc, bfc)


# --------------------------------------------------------------------------- #
# Shared device decode path: embed+PE -> attention kernel -> fc/top-k kernel
# --------------------------------------------------------------------------- #
def _decode_topk(emb, pe, wo, wfc, bfc, enc, mask, tokens, position,
                 *, beam_k, d_real, v_tile, n_split):
    bsz, kp = tokens.shape
    dp = emb.shape[1]
    pe_row = lax.dynamic_index_in_dim(pe, position, 0, keepdims=False)
    q = (jnp.take(emb, tokens, axis=0) * math.sqrt(float(d_real))
         + pe_row[None, None, :]).astype(jnp.bfloat16)
    h = attention_hidden_pallas(q, enc, mask, wo, d_real=d_real)      # (B, kp, dp)
    h2 = h.reshape(bsz * kp, dp)                                      # batch folded into M
    topv, topi, lse_h = fc_topk_pallas(h2, wfc, bfc, beam_k=beam_k,
                                       v_tile=v_tile, n_split=n_split)
    vall = jnp.concatenate([topv[s, :, :beam_k] for s in range(n_split)], axis=-1)
    iall = jnp.concatenate([topi[s, :, :beam_k] for s in range(n_split)], axis=-1)
    if n_split > 1:
        vals, pos = lax.top_k(vall, beam_k)
        idxs = jnp.take_along_axis(iall, pos, axis=-1)
    else:
        vals, idxs = vall, iall
    lse = lse_h[0]
    for s in range(1, n_split):
        lse = jnp.logaddexp(lse, lse_h[s])
    logp = vals - lse                         # exact log_softmax values of the winners
    return logp.reshape(bsz, kp, beam_k), idxs.reshape(bsz, kp, beam_k)


@partial(jax.jit, static_argnames=("beam_k", "d_real", "v_tile", "n_split"))
def decode_first(emb, pe, wo, wfc, bfc, enc, mask, tokens, position,
                 *, beam_k, d_real, v_tile, n_split):
    logp, ids = _decode_topk(emb, pe, wo, wfc, bfc, enc, mask, tokens, position,
                             beam_k=beam_k, d_real=d_real,
                             v_tile=v_tile, n_split=n_split)
    return logp[:, 0, :], ids[:, 0, :]


@partial(jax.jit, static_argnames=("beam_k", "d_real", "v_tile", "n_split"))
def decode_next(emb, pe, wo, wfc, bfc, enc, mask, tokens, position, cumulative_ps,
                *, beam_k, d_real, v_tile, n_split):
    logp, ids = _decode_topk(emb, pe, wo, wfc, bfc, enc, mask, tokens, position,
                             beam_k=beam_k, d_real=d_real,
                             v_tile=v_tile, n_split=n_split)
    k = beam_k
    bsz = tokens.shape[0]
    # k x k candidate merge done on device (cumulative add + full descending order)
    cand_ps = logp[:, :k, :] + cumulative_ps[:, :, None]              # (B, k, k)
    flat_ps = cand_ps.reshape(bsz, k * k)
    flat_vs = ids[:, :k, :].reshape(bsz, k * k)
    order_vals, order_ids = lax.top_k(flat_ps, k * k)
    topk_ps = order_vals[:, :k]
    topk_status = order_ids[:, :k]
    topk_vs = jnp.take_along_axis(flat_vs, topk_status, axis=-1)
    prev_ids = topk_status // k
    return topk_ps, topk_vs, prev_ids, flat_ps, flat_vs, order_ids


# --------------------------------------------------------------------------- #
# Deterministic synthetic decoder parameters
# --------------------------------------------------------------------------- #
def make_params(key, vocab, d_model, max_len):
    k1, k2, k3, k4, k5 = jax.random.split(key, 5)
    return dict(
        emb=jax.random.normal(k1, (vocab, d_model), jnp.float32) * 0.1,
        pe=jax.random.normal(k2, (max_len, d_model), jnp.float32) * 0.1,
        wo=jax.random.normal(k3, (d_model, d_model), jnp.float32) / math.sqrt(d_model),
        wfc=jax.random.normal(k4, (d_model, vocab), jnp.float32) / math.sqrt(d_model),
        bfc=jax.random.normal(k5, (1, vocab), jnp.float32) * 0.1,
    )


# --------------------------------------------------------------------------- #
# Beam-search driver (host bookkeeping mirrors the PyTorch reference)
# --------------------------------------------------------------------------- #
class BeamSearchDecoderPallas:
    def __init__(self, params, beam_size=3, max_length=8,
                 sos_id=1, eos_id=2, pad_id=0, num_classes=10):
        self.beam_size = beam_size
        self.max_length = max_length
        self.sos_id = sos_id
        self.eos_id = eos_id
        self.pad_id = pad_id
        self.num_classes = num_classes

        emb = np.asarray(params["emb"], np.float32)
        pe = np.asarray(params["pe"], np.float32)
        wo = np.asarray(params["wo"], np.float32)
        wfc = np.asarray(params["wfc"], np.float32)
        bfc = np.asarray(params["bfc"], np.float32)

        v, d = emb.shape
        assert beam_size < v, "padded vocab columns (-1e9) must never enter the top-k"
        self.d_model = d
        self.D_pad = _round_up(d, 128)
        self.K_pad = _round_up(max(beam_size, 1), 8)

        # vocab tiling: large lane-dense tiles (512) when the vocab is big enough,
        # padded so the tile count divides evenly into n_split parallel halves (v7x).
        v128 = _round_up(v, 128)
        self.v_tile = min(512, v128)
        self.V_pad = _round_up(v128, self.v_tile)
        n_vt_total = self.V_pad // self.v_tile
        self.n_split = 2 if (n_vt_total >= 2 and n_vt_total % 2 == 0) else 1

        # Zero-pad parameters (padded rows/cols contribute nothing; padded vocab
        # logits are pinned to -1e9 via the bias).
        emb_p = np.zeros((self.V_pad, self.D_pad), np.float32); emb_p[:v, :d] = emb
        # TODO(synk): positions beyond the provided PE table silently use a zero PE.
        n_pe = max(max_length, pe.shape[0])
        pe_p = np.zeros((n_pe, self.D_pad), np.float32); pe_p[:pe.shape[0], :d] = pe
        wo_p = np.zeros((self.D_pad, self.D_pad), np.float32); wo_p[:d, :d] = wo
        wfc_p = np.zeros((self.D_pad, self.V_pad), np.float32); wfc_p[:d, :v] = wfc
        bfc_p = np.full((1, self.V_pad), -1e9, np.float32); bfc_p[0, :v] = bfc[0]

        self.emb = jnp.asarray(emb_p)                     # f32 (query built in f32)
        self.pe = jnp.asarray(pe_p)
        self.wo = jnp.asarray(wo_p, jnp.bfloat16)         # bf16 weights (MXU native)
        self.wfc = jnp.asarray(wfc_p, jnp.bfloat16)
        # TODO(synk): on v5e/v6e an int8-quantized wfc (per-column scale) would halve the
        # weight stream; skipped here to keep one code path (v7x MXU has no int8).
        self.bfc = jnp.asarray(bfc_p)                     # f32

    # ------------------------------ device steps -----------------------------
    def _step_first(self, tokens_np, position, enc_p, mask_p):
        vals, idxs = decode_first(
            self.emb, self.pe, self.wo, self.wfc, self.bfc, enc_p, mask_p,
            jnp.asarray(tokens_np, jnp.int32), jnp.asarray(position, jnp.int32),
            beam_k=self.beam_size, d_real=self.d_model,
            v_tile=self.v_tile, n_split=self.n_split)
        vals, idxs = jax.device_get((vals, idxs))
        return np.asarray(vals, np.float32), np.asarray(idxs, np.int64)

    def _step_next(self, tokens_np, position, enc_p, mask_p, cum_np):
        out = decode_next(
            self.emb, self.pe, self.wo, self.wfc, self.bfc, enc_p, mask_p,
            jnp.asarray(tokens_np, jnp.int32), jnp.asarray(position, jnp.int32),
            jnp.asarray(cum_np, jnp.float32),
            beam_k=self.beam_size, d_real=self.d_model,
            v_tile=self.v_tile, n_split=self.n_split)
        return tuple(np.asarray(x) for x in jax.device_get(out))

    # ---------------------------- reference helpers --------------------------
    def _is_all_finished(self, k):
        for done in self.finished:
            if len(done) < k:
                return False
        return True

    def _get_successor(self, current_ps, current_vs, order, finished_ids,
                       num_successor, eos_count, k):
        b, idx = finished_ids
        successor_idx = int(order[b, k + num_successor - 1])
        successor_p = float(current_ps[b, successor_idx])
        successor_v = int(current_vs[b, successor_idx])
        prev_status_idx = successor_idx // k
        prev_status = np.asarray(self.ongoing_beams[b, prev_status_idx]).reshape(-1)[:-1]
        successor = np.concatenate([prev_status, np.array([successor_v], dtype=np.int64)])
        if successor_v == self.eos_id:
            self.finished[b].append(successor)
            self.finished_ps[b].append(successor_p)
            eos_count = self._get_successor(current_ps, current_vs, order, finished_ids,
                                            num_successor + eos_count, eos_count + 1, k)
        else:
            self.ongoing_beams[b, idx] = successor
            self.cumulative_ps[b, idx] = successor_p
        return eos_count

    def _fill_sequence(self, y_hats):
        bs = len(y_hats)
        max_len = max(len(y) for y in y_hats)
        out = np.full((bs, max_len), int(self.pad_id), dtype=np.int64)
        for b, y in enumerate(y_hats):
            out[b, : len(y)] = np.asarray(y, dtype=np.int64)
        return jnp.asarray(out)

    def _get_predictions(self):
        preds = []
        for b, batch in enumerate(self.finished):
            if len(batch) == 0:
                top = int(np.argmax(np.asarray(self.cumulative_ps[b])))
                preds.append(np.asarray(self.ongoing_beams[b, top]))
            else:
                top = int(np.argmax(np.asarray(self.finished_ps[b])))
                preds.append(np.asarray(self.finished[b][top]))
        return self._fill_sequence(preds)

    # -------------------------------- forward --------------------------------
    def forward(self, encoder_outputs, encoder_output_lengths):
        # TODO(synk): finished-beam lists, recursive _get_successor and early exit are
        # data-dependent host control flow — kept in Python/numpy, not in the kernel.
        enc = np.asarray(encoder_outputs, np.float32)
        enc_len = np.asarray(encoder_output_lengths)
        batch_size, s, d = enc.shape
        k = self.beam_size
        K_pad, D_pad = self.K_pad, self.D_pad
        S_pad = _round_up(max(s, 8), 128)

        # Pad encoder outputs once (no beam inflation — beams share the batch block).
        enc_p_np = np.zeros((batch_size, S_pad, D_pad), np.float32)
        enc_p_np[:, :s, :d] = enc
        enc_p = jnp.asarray(enc_p_np, jnp.bfloat16)
        ar = np.arange(S_pad)[None, :]
        mask_p = jnp.asarray(
            np.where(ar < enc_len[:, None], 0.0, -1e9).astype(np.float32)[:, None, :])

        self.finished = [[] for _ in range(batch_size)]
        self.finished_ps = [[] for _ in range(batch_size)]

        # step 1: all-SOS input, positional_encoding_length = 1
        tokens = np.full((batch_size, K_pad), self.sos_id, np.int32)
        vals0, ids0 = self._step_first(tokens, 0, enc_p, mask_p)       # (B, k)
        self.ongoing_beams = ids0.astype(np.int64).reshape(batch_size * k, 1)
        self.cumulative_ps = vals0.astype(np.float32).reshape(batch_size * k, 1)

        decoder_inputs = np.full((batch_size * k, 1), self.sos_id, dtype=np.int64)
        decoder_inputs = np.concatenate([decoder_inputs, self.ongoing_beams], axis=-1)

        for di in range(2, self.max_length):
            if self._is_all_finished(k):
                break
            last = decoder_inputs[:, di - 1].reshape(batch_size, k)
            tokens = np.full((batch_size, K_pad), self.sos_id, np.int32)
            tokens[:, :k] = last
            cum = self.cumulative_ps.reshape(batch_size, k).astype(np.float32)

            (topk_ps, topk_vs, prev_ids, flat_ps, flat_vs, order) = self._step_next(
                tokens, di - 1, enc_p, mask_p, cum)

            self.ongoing_beams = np.asarray(self.ongoing_beams).reshape(batch_size, k, -1)
            prev_status = self.ongoing_beams[np.arange(batch_size)[:, None], prev_ids]
            self.ongoing_beams = np.concatenate(
                [prev_status.astype(np.int64), topk_vs.astype(np.int64)[:, :, None]],
                axis=2)
            self.cumulative_ps = topk_ps.astype(np.float32).copy()

            if np.any(topk_vs == self.eos_id):
                finished_ids = np.where(topk_vs == self.eos_id)
                num_successors = [1] * batch_size
                for b, idx in zip(*finished_ids):
                    b, idx = int(b), int(idx)
                    self.finished[b].append(self.ongoing_beams[b, idx].copy())
                    self.finished_ps[b].append(float(self.cumulative_ps[b, idx]))
                    if k != 1:
                        eos_count = self._get_successor(
                            flat_ps.astype(np.float32), flat_vs.astype(np.int64), order,
                            (b, idx), num_successors[b], 1, k)
                        num_successors[b] += eos_count

            ongoing = self.ongoing_beams.reshape(batch_size * k, -1)
            decoder_inputs = np.concatenate([decoder_inputs, ongoing[:, :-1]], axis=-1)

        return self._get_predictions()


if __name__ == "__main__":
    BATCH, BEAM, SEQ, D_MODEL, VOCAB, MAX_LEN = 2, 3, 16, 32, 10, 8
    key = jax.random.PRNGKey(0)
    pkey, ekey = jax.random.split(key)

    params = make_params(pkey, VOCAB, D_MODEL, MAX_LEN)
    encoder_outputs = jax.random.normal(ekey, (BATCH, SEQ, D_MODEL), jnp.float32)
    encoder_output_lengths = jnp.array([SEQ, SEQ - 4], dtype=jnp.int32)

    decoder = BeamSearchDecoderPallas(params, beam_size=BEAM, max_length=MAX_LEN,
                                      sos_id=1, eos_id=2, pad_id=0, num_classes=VOCAB)
    preds = decoder.forward(encoder_outputs, encoder_output_lengths)
    jax.block_until_ready(preds)
    print("KERNEL_OK")
</pallas_src>

<mosaic_0001>
module attributes {stable_mosaic.version = 11 : i64} {
  func.func @kernel(%arg0: i32, %arg1: memref<1x8x128xbf16, #tpu.memory_space<vmem>>, %arg2: memref<1x128x128xbf16, #tpu.memory_space<vmem>>, %arg3: memref<1x1x128xf32, #tpu.memory_space<vmem>>, %arg4: memref<128x128xbf16, #tpu.memory_space<vmem>>, %arg5: memref<1x8x128xbf16, #tpu.memory_space<vmem>>) attributes {dimension_semantics = [#tpu.dimension_semantics<parallel>], iteration_bounds = array<i64: 2>, scalar_prefetch = 0 : i64, scratch_operands = 0 : i64, tpu.core_type = #tpu.core_type<tc>, window_params = [{transform_indices = @transform_0, window_bounds = array<i64: 1, 8, 128>}, {transform_indices = @transform_1, window_bounds = array<i64: 1, 128, 128>}, {transform_indices = @transform_2, window_bounds = array<i64: 1, 1, 128>}, {pipeline_mode = #tpu.pipeline_mode<synchronous>, transform_indices = @transform_3, window_bounds = array<i64: 128, 128>}, {transform_indices = @transform_4, window_bounds = array<i64: 1, 8, 128>}]} {
    %c0 = arith.constant 0 : index
    %c0_0 = arith.constant 0 : index
    %c0_1 = arith.constant 0 : index
    %0 = vector.load %arg1[%c0, %c0_0, %c0_1] : memref<1x8x128xbf16, #tpu.memory_space<vmem>>, vector<1x8x128xbf16>
    %1 = vector.shape_cast %0 : vector<1x8x128xbf16> to vector<8x128xbf16>
    %c0_2 = arith.constant 0 : index
    %c0_3 = arith.constant 0 : index
    %c0_4 = arith.constant 0 : index
    %2 = vector.load %arg2[%c0_2, %c0_3, %c0_4] : memref<1x128x128xbf16, #tpu.memory_space<vmem>>, vector<1x128x128xbf16>
    %3 = vector.shape_cast %2 : vector<1x128x128xbf16> to vector<128x128xbf16>
    %cst = arith.constant dense<0.000000e+00> : vector<8x128xf32>
    %4 = tpu.matmul %1, %3, %cst {dimension_numbers = #tpu.dot_dimension_numbers<[1], [1], [0], [0], [0, 0, 1, 0], [], []>} : vector<8x128xbf16>, vector<128x128xbf16>, vector<8x128xf32> -> vector<8x128xf32>
    %cst_5 = arith.constant 0.176776692 : f32
    %5 = vector.broadcast %cst_5 : f32 to vector<8x128xf32>
    %6 = arith.mulf %4, %5 : vector<8x128xf32>
    %c0_6 = arith.constant 0 : index
    %c0_7 = arith.constant 0 : index
    %c0_8 = arith.constant 0 : index
    %7 = vector.load %arg3[%c0_6, %c0_7, %c0_8] : memref<1x1x128xf32, #tpu.memory_space<vmem>>, vector<1x1x128xf32>
    %8 = vector.shape_cast %7 : vector<1x1x128xf32> to vector<1x128xf32>
    %9 = vector.broadcast %8 : vector<1x128xf32> to vector<8x128xf32>
    %10 = arith.addf %6, %9 : vector<8x128xf32>
    %cst_9 = arith.constant dense<0xFF800000> : vector<8xf32>
    %11 = vector.multi_reduction <maximumf>, %10, %cst_9 [1] : vector<8x128xf32> to vector<8xf32>
    %12 = vector.shape_cast %11 : vector<8xf32> to vector<8x1xf32>
    %13 = vector.broadcast %12 : vector<8x1xf32> to vector<8x128xf32>
    %14 = arith.subf %10, %13 : vector<8x128xf32>
    %15 = math.exp %14 : vector<8x128xf32>
    %cst_10 = arith.constant dense<0.000000e+00> : vector<8xf32>
    %16 = vector.multi_reduction <add>, %15, %cst_10 [1] : vector<8x128xf32> to vector<8xf32>
    %17 = vector.shape_cast %16 : vector<8xf32> to vector<8x1xf32>
    %18 = vector.broadcast %17 : vector<8x1xf32> to vector<8x128xf32>
    %19 = arith.divf %15, %18 : vector<8x128xf32>
    %20 = arith.truncf %19 : vector<8x128xf32> to vector<8x128xbf16>
    %cst_11 = arith.constant dense<0.000000e+00> : vector<8x128xf32>
    %21 = tpu.matmul %20, %3, %cst_11 {dimension_numbers = #tpu.dot_dimension_numbers<[1], [0], [0], [1], [0, 0, 1, 1], [], []>} : vector<8x128xbf16>, vector<128x128xbf16>, vector<8x128xf32> -> vector<8x128xf32>
    %22 = arith.truncf %21 : vector<8x128xf32> to vector<8x128xbf16>
    %c0_12 = arith.constant 0 : index
    %c0_13 = arith.constant 0 : index
    %23 = vector.load %arg4[%c0_12, %c0_13] : memref<128x128xbf16, #tpu.memory_space<vmem>>, vector<128x128xbf16>
    %cst_14 = arith.constant dense<0.000000e+00> : vector<8x128xf32>
    %24 = tpu.matmul %22, %23, %cst_14 {dimension_numbers = #tpu.dot_dimension_numbers<[1], [0], [0], [1], [0, 0, 1, 1], [], []>} : vector<8x128xbf16>, vector<128x128xbf16>, vector<8x128xf32> -> vector<8x128xf32>
    %25 = math.tanh %24 : vector<8x128xf32>
    %26 = arith.truncf %25 : vector<8x128xf32> to vector<8x128xbf16>
    %c0_15 = arith.constant 0 : index
    %c0_16 = arith.constant 0 : index
    %c0_17 = arith.constant 0 : index
    %27 = vector.load %arg5[%c0_15, %c0_16, %c0_17] : memref<1x8x128xbf16, #tpu.memory_space<vmem>>, vector<1x8x128xbf16>
    %28 = vector.shape_cast %27 : vector<1x8x128xbf16> to vector<8x128xbf16>
    %29 = vector.shape_cast %26 : vector<8x128xbf16> to vector<1x8x128xbf16>
    tpu.vector_store %arg5[%c0_15, %c0_16, %c0_17], %29 {strides = array<i32>} : memref<1x8x128xbf16, #tpu.memory_space<vmem>>, vector<1x8x128xbf16>,
    return
  }
  func.func @transform_0(%arg0: i32) -> (i32, i32, i32) {
    %c0_i32 = arith.constant 0 : i32
    %c0_i32_0 = arith.constant 0 : i32
    %c0_i32_1 = arith.constant 0 : i32
    return %arg0, %c0_i32, %c0_i32_0 : i32, i32, i32
  }
  func.func @transform_1(%arg0: i32) -> (i32, i32, i32) {
    %c0_i32 = arith.constant 0 : i32
    %c0_i32_0 = arith.constant 0 : i32
    %c0_i32_1 = arith.constant 0 : i32
    return %arg0, %c0_i32, %c0_i32_0 : i32, i32, i32
  }
  func.func @transform_2(%arg0: i32) -> (i32, i32, i32) {
    %c0_i32 = arith.constant 0 : i32
    %c0_i32_0 = arith.constant 0 : i32
    %c0_i32_1 = arith.constant 0 : i32
    return %arg0, %c0_i32, %c0_i32_0 : i32, i32, i32
  }
  func.func @transform_3(%arg0: i32) -> (i32, i32) {
    %c0_i32 = arith.constant 0 : i32
    %c0_i32_0 = arith.constant 0 : i32
    %c0_i32_1 = arith.constant 0 : i32
    return %c0_i32, %c0_i32_0 : i32, i32
  }
  func.func @transform_4(%arg0: i32) -> (i32, i32, i32) {
    %c0_i32 = arith.constant 0 : i32
    %c0_i32_0 = arith.constant 0 : i32
    %c0_i32_1 = arith.constant 0 : i32
    return %arg0, %c0_i32, %c0_i32_0 : i32, i32, i32
  }
}

module attributes {stable_mosaic.version = 11 : i64} {
  func.func @kernel(%arg0: i32, %arg1: i32, %arg2: memref<16x128xbf16, #tpu.memory_space<vmem>>, %arg3: memref<128x128xbf16, #tpu.memory_space<vmem>>, %arg4: memref<1x128xf32, #tpu.memory_space<vmem>>, %arg5: memref<1x16x128xf32, #tpu.memory_space<vmem>>, %arg6: memref<1x16x128xi32, #tpu.memory_space<vmem>>, %arg7: memref<1x16x1xf32, #tpu.memory_space<vmem>>, %arg8: memref<16x1xf32, #tpu.memory_space<vmem>>, %arg9: memref<16x1xf32, #tpu.memory_space<vmem>>, %arg10: memref<16x128xf32, #tpu.memory_space<vmem>>, %arg11: memref<16x128xi32, #tpu.memory_space<vmem>>) attributes {dimension_semantics = [#tpu.dimension_semantics<parallel>, #tpu.dimension_semantics<arbitrary>], iteration_bounds = array<i64: 1, 1>, scalar_prefetch = 0 : i64, scratch_operands = 4 : i64, tpu.core_type = #tpu.core_type<tc>, window_params = [{pipeline_mode = #tpu.pipeline_mode<synchronous>, transform_indices = @transform_0, window_bounds = array<i64: 16, 128>}, {transform_indices = @transform_1, window_bounds = array<i64: 128, 128>}, {transform_indices = @transform_2, window_bounds = array<i64: 1, 128>}, {transform_indices = @transform_3, window_bounds = array<i64: 1, 16, 128>}, {transform_indices = @transform_4, window_bounds = array<i64: 1, 16, 128>}, {transform_indices = @transform_5, window_bounds = array<i64: 1, 16, 1>}]} {
    %c0_i32 = arith.constant 0 : i32
    %0 = arith.cmpi eq, %arg1, %c0_i32 : i32
    %1 = arith.extui %0 : i1 to i32
    %c0_i32_0 = arith.constant 0 : i32
    %2 = arith.cmpi ne, %1, %c0_i32_0 : i32
    scf.if %2 {
      %cst_62 = arith.constant -1.000000e+30 : f32
      %172 = vector.broadcast %cst_62 : f32 to vector<16x1xf32>
      %c0_63 = arith.constant 0 : index
      %c0_64 = arith.constant 0 : index
      %173 = vector.load %arg8[%c0_63, %c0_64] : memref<16x1xf32, #tpu.memory_space<vmem>>, vector<16x1xf32>
      tpu.vector_store %arg8[%c0_63, %c0_64], %172 {strides = array<i32>} : memref<16x1xf32, #tpu.memory_space<vmem>>, vector<16x1xf32>,
      %cst_65 = arith.constant 0.000000e+00 : f32
      %174 = vector.broadcast %cst_65 : f32 to vector<16x1xf32>
      %c0_66 = arith.constant 0 : index
      %c0_67 = arith.constant 0 : index
      %175 = vector.load %arg9[%c0_66, %c0_67] : memref<16x1xf32, #tpu.memory_space<vmem>>, vector<16x1xf32>
      tpu.vector_store %arg9[%c0_66, %c0_67], %174 {strides = array<i32>} : memref<16x1xf32, #tpu.memory_space<vmem>>, vector<16x1xf32>,
      %cst_68 = arith.constant -1.000000e+30 : f32
      %176 = vector.broadcast %cst_68 : f32 to vector<16x128xf32>
      %c0_69 = arith.constant 0 : index
      %c0_70 = arith.constant 0 : index
      %177 = vector.load %arg10[%c0_69, %c0_70] : memref<16x128xf32, #tpu.memory_space<vmem>>, vector<16x128xf32>
      tpu.vector_store %arg10[%c0_69, %c0_70], %176 {strides = array<i32>} : memref<16x128xf32, #tpu.memory_space<vmem>>, vector<16x128xf32>,
      %c0_i32_71 = arith.constant 0 : i32
      %178 = vector.broadcast %c0_i32_71 : i32 to vector<16x128xi32>
      %c0_72 = arith.constant 0 : index
      %c0_73 = arith.constant 0 : index
      %179 = vector.load %arg11[%c0_72, %c0_73] : memref<16x128xi32, #tpu.memory_space<vmem>>, vector<16x128xi32>
      tpu.vector_store %arg11[%c0_72, %c0_73], %178 {strides = array<i32>} : memref<16x128xi32, #tpu.memory_space<vmem>>, vector<16x128xi32>,
    } else {
    }
    %c0 = arith.constant 0 : index
    %c0_1 = arith.constant 0 : index
    %3 = vector.load %arg2[%c0, %c0_1] : memref<16x128xbf16, #tpu.memory_space<vmem>>, vector<16x128xbf16>
    %c0_2 = arith.constant 0 : index
    %c0_3 = arith.constant 0 : index
    %4 = vector.load %arg3[%c0_2, %c0_3] : memref<128x128xbf16, #tpu.memory_space<vmem>>, vector<128x128xbf16>
    %cst = arith.constant dense<0.000000e+00> : vector<16x128xf32>
    %5 = tpu.matmul %3, %4, %cst {dimension_numbers = #tpu.dot_dimension_numbers<[1], [0], [0], [1], [0, 0, 1, 1], [], []>} : vector<16x128xbf16>, vector<128x128xbf16>, vector<16x128xf32> -> vector<16x128xf32>
    %c0_4 = arith.constant 0 : index
    %c0_5 = arith.constant 0 : index
    %6 = vector.load %arg4[%c0_4, %c0_5] : memref<1x128xf32, #tpu.memory_space<vmem>>, vector<1x128xf32>
    %7 = vector.broadcast %6 : vector<1x128xf32> to vector<16x128xf32>
    %8 = arith.addf %5, %7 : vector<16x128xf32>
    %c0_6 = arith.constant 0 : index
    %c0_7 = arith.constant 0 : index
    %9 = vector.load %arg8[%c0_6, %c0_7] : memref<16x1xf32, #tpu.memory_space<vmem>>, vector<16x1xf32>
    %cst_8 = arith.constant dense<0xFF800000> : vector<16xf32>
    %10 = vector.multi_reduction <maximumf>, %8, %cst_8 [1] : vector<16x128xf32> to vector<16xf32>
    %11 = vector.shape_cast %10 : vector<16xf32> to vector<16x1xf32>
    %12 = arith.maximumf %9, %11 : vector<16x1xf32>
    %c0_9 = arith.constant 0 : index
    %c0_10 = arith.constant 0 : index
    %13 = vector.load %arg9[%c0_9, %c0_10] : memref<16x1xf32, #tpu.memory_space<vmem>>, vector<16x1xf32>
    %14 = arith.subf %9, %12 : vector<16x1xf32>
    %15 = math.exp %14 : vector<16x1xf32>
    %16 = arith.mulf %13, %15 : vector<16x1xf32>
    %17 = vector.broadcast %12 : vector<16x1xf32> to vector<16x128xf32>
    %18 = arith.subf %8, %17 : vector<16x128xf32>
    %19 = math.exp %18 : vector<16x128xf32>
    %cst_11 = arith.constant dense<0.000000e+00> : vector<16xf32>
    %20 = vector.multi_reduction <add>, %19, %cst_11 [1] : vector<16x128xf32> to vector<16xf32>
    %21 = vector.shape_cast %20 : vector<16xf32> to vector<16x1xf32>
    %22 = arith.addf %16, %21 : vector<16x1xf32>
    %c0_12 = arith.constant 0 : index
    %c0_13 = arith.constant 0 : index
    %23 = vector.load %arg9[%c0_12, %c0_13] : memref<16x1xf32, #tpu.memory_space<vmem>>, vector<16x1xf32>
    tpu.vector_store %arg9[%c0_12, %c0_13], %22 {strides = array<i32>} : memref<16x1xf32, #tpu.memory_space<vmem>>, vector<16x1xf32>,
    %c0_14 = arith.constant 0 : index
    %c0_15 = arith.constant 0 : index
    %24 = vector.load %arg8[%c0_14, %c0_15] : memref<16x1xf32, #tpu.memory_space<vmem>>, vector<16x1xf32>
    tpu.vector_store %arg8[%c0_14, %c0_15], %12 {strides = array<i32>} : memref<16x1xf32, #tpu.memory_space<vmem>>, vector<16x1xf32>,
    %25 = tpu.iota {dimensions = array<i32: 1>} : vector<16x128xi32>
    %c1_i32 = arith.constant 1 : i32
    %26 = arith.muli %arg0, %c1_i32 : i32
    %27 = arith.addi %26, %arg1 : i32
    %c128_i32 = arith.constant 128 : i32
    %28 = arith.muli %27, %c128_i32 : i32
    %29 = vector.broadcast %28 : i32 to vector<16x128xi32>
    %30 = arith.addi %25, %29 : vector<16x128xi32>
    %31 = tpu.iota {dimensions = array<i32: 1>} : vector<16x128xi32>
    %c0_16 = arith.constant 0 : index
    %c0_17 = arith.constant 0 : index
    %32 = vector.load %arg10[%c0_16, %c0_17] : memref<16x128xf32, #tpu.memory_space<vmem>>, vector<16x128xf32>
    %c0_18 = arith.constant 0 : index
    %c0_19 = arith.constant 0 : index
    %33 = vector.load %arg11[%c0_18, %c0_19] : memref<16x128xi32, #tpu.memory_space<vmem>>, vector<16x128xi32>
    %cst_20 = arith.constant -1.000000e+30 : f32
    %34 = vector.broadcast %cst_20 : f32 to vector<16x128xf32>
    %c0_i32_21 = arith.constant 0 : i32
    %35 = vector.broadcast %c0_i32_21 : i32 to vector<16x128xi32>
    %cst_22 = arith.constant dense<0xFF800000> : vector<16xf32>
    %36 = vector.multi_reduction <maximumf>, %8, %cst_22 [1] : vector<16x128xf32> to vector<16xf32>
    %37 = vector.shape_cast %36 : vector<16xf32> to vector<16x1xf32>
    %cst_23 = arith.constant dense<0xFF800000> : vector<16xf32>
    %38 = vector.multi_reduction <maximumf>, %32, %cst_23 [1] : vector<16x128xf32> to vector<16xf32>
    %39 = vector.shape_cast %38 : vector<16xf32> to vector<16x1xf32>
    %40 = arith.cmpf ogt, %37, %39 : vector<16x1xf32>
    %41 = arith.maximumf %37, %39 : vector<16x1xf32>
    %42 = vector.broadcast %37 : vector<16x1xf32> to vector<16x128xf32>
    %43 = arith.cmpf oeq, %8, %42 : vector<16x128xf32>
    %c1073741824_i32 = arith.constant 1073741824 : i32
    %44 = vector.broadcast %c1073741824_i32 : i32 to vector<16x128xi32>
    %45 = arith.select %43, %30, %44 : vector<16x128xi1>, vector<16x128xi32>
    %cst_24 = arith.constant dense<2147483647> : vector<16xi32>
    %46 = vector.multi_reduction <minsi>, %45, %cst_24 [1] : vector<16x128xi32> to vector<16xi32>
    %47 = vector.shape_cast %46 : vector<16xi32> to vector<16x1xi32>
    %48 = vector.broadcast %39 : vector<16x1xf32> to vector<16x128xf32>
    %49 = arith.cmpf oeq, %32, %48 : vector<16x128xf32>
    %c1073741824_i32_25 = arith.constant 1073741824 : i32
    %50 = vector.broadcast %c1073741824_i32_25 : i32 to vector<16x128xi32>
    %51 = arith.select %49, %31, %50 : vector<16x128xi1>, vector<16x128xi32>
    %cst_26 = arith.constant dense<2147483647> : vector<16xi32>
    %52 = vector.multi_reduction <minsi>, %51, %cst_26 [1] : vector<16x128xi32> to vector<16xi32>
    %53 = vector.shape_cast %52 : vector<16xi32> to vector<16x1xi32>
    %54 = vector.broadcast %53 : vector<16x1xi32> to vector<16x128xi32>
    %55 = arith.cmpi eq, %31, %54 : vector<16x128xi32>
    %c0_i32_27 = arith.constant 0 : i32
    %56 = vector.broadcast %c0_i32_27 : i32 to vector<16x128xi32>
    %57 = arith.select %55, %33, %56 : vector<16x128xi1>, vector<16x128xi32>
    %cst_28 = arith.constant dense<0> : vector<16xi32>
    %58 = vector.multi_reduction <add>, %57, %cst_28 [1] : vector<16x128xi32> to vector<16xi32>
    %59 = vector.shape_cast %58 : vector<16xi32> to vector<16x1xi32>
    %60 = arith.select %40, %47, %59 : vector<16x1xi1>, vector<16x1xi32>
    %c0_i32_29 = arith.constant 0 : i32
    %61 = vector.broadcast %c0_i32_29 : i32 to vector<16x128xi32>
    %62 = arith.cmpi eq, %31, %61 : vector<16x128xi32>
    %63 = vector.shape_cast %41 : vector<16x1xf32> to vector<16x1xf32>
    %64 = vector.broadcast %63 : vector<16x1xf32> to vector<16x128xf32>
    %65 = arith.select %62, %64, %34 : vector<16x128xi1>, vector<16x128xf32>
    %c0_i32_30 = arith.constant 0 : i32
    %66 = vector.broadcast %c0_i32_30 : i32 to vector<16x128xi32>
    %67 = arith.cmpi eq, %31, %66 : vector<16x128xi32>
    %68 = vector.shape_cast %60 : vector<16x1xi32> to vector<16x1xi32>
    %69 = vector.broadcast %68 : vector<16x1xi32> to vector<16x128xi32>
    %70 = arith.select %67, %69, %35 : vector<16x128xi1>, vector<16x128xi32>
    %71 = vector.broadcast %47 : vector<16x1xi32> to vector<16x128xi32>
    %72 = arith.cmpi eq, %30, %71 : vector<16x128xi32>
    %73 = vector.broadcast %40 : vector<16x1xi1> to vector<16x128xi1>
    %74 = arith.andi %73, %72 : vector<16x128xi1>
    %cst_31 = arith.constant -1.000000e+30 : f32
    %75 = vector.broadcast %cst_31 : f32 to vector<16x128xf32>
    %76 = arith.select %74, %75, %8 : vector<16x128xi1>, vector<16x128xf32>
    %cst_32 = arith.constant dense<true> : vector<16x1xi1>
    %77 = arith.xori %40, %cst_32 : vector<16x1xi1>
    %78 = vector.broadcast %53 : vector<16x1xi32> to vector<16x128xi32>
    %79 = arith.cmpi eq, %31, %78 : vector<16x128xi32>
    %80 = vector.broadcast %77 : vector<16x1xi1> to vector<16x128xi1>
    %81 = arith.andi %80, %79 : vector<16x128xi1>
    %cst_33 = arith.constant -1.000000e+30 : f32
    %82 = vector.broadcast %cst_33 : f32 to vector<16x128xf32>
    %83 = arith.select %81, %82, %32 : vector<16x128xi1>, vector<16x128xf32>
    %cst_34 = arith.constant dense<0xFF800000> : vector<16xf32>
    %84 = vector.multi_reduction <maximumf>, %76, %cst_34 [1] : vector<16x128xf32> to vector<16xf32>
    %85 = vector.shape_cast %84 : vector<16xf32> to vector<16x1xf32>
    %cst_35 = arith.constant dense<0xFF800000> : vector<16xf32>
    %86 = vector.multi_reduction <maximumf>, %83, %cst_35 [1] : vector<16x128xf32> to vector<16xf32>
    %87 = vector.shape_cast %86 : vector<16xf32> to vector<16x1xf32>
    %88 = arith.cmpf ogt, %85, %87 : vector<16x1xf32>
    %89 = arith.maximumf %85, %87 : vector<16x1xf32>
    %90 = vector.broadcast %85 : vector<16x1xf32> to vector<16x128xf32>
    %91 = arith.cmpf oeq, %76, %90 : vector<16x128xf32>
    %c1073741824_i32_36 = arith.constant 1073741824 : i32
    %92 = vector.broadcast %c1073741824_i32_36 : i32 to vector<16x128xi32>
    %93 = arith.select %91, %30, %92 : vector<16x128xi1>, vector<16x128xi32>
    %cst_37 = arith.constant dense<2147483647> : vector<16xi32>
    %94 = vector.multi_reduction <minsi>, %93, %cst_37 [1] : vector<16x128xi32> to vector<16xi32>
    %95 = vector.shape_cast %94 : vector<16xi32> to vector<16x1xi32>
    %96 = vector.broadcast %87 : vector<16x1xf32> to vector<16x128xf32>
    %97 = arith.cmpf oeq, %83, %96 : vector<16x128xf32>
    %c1073741824_i32_38 = arith.constant 1073741824 : i32
    %98 = vector.broadcast %c1073741824_i32_38 : i32 to vector<16x128xi32>
    %99 = arith.select %97, %31, %98 : vector<16x128xi1>, vector<16x128xi32>
    %cst_39 = arith.constant dense<2147483647> : vector<16xi32>
    %100 = vector.multi_reduction <minsi>, %99, %cst_39 [1] : vector<16x128xi32> to vector<16xi32>
    %101 = vector.shape_cast %100 : vector<16xi32> to vector<16x1xi32>
    %102 = vector.broadcast %101 : vector<16x1xi32> to vector<16x128xi32>
    %103 = arith.cmpi eq, %31, %102 : vector<16x128xi32>
    %c0_i32_40 = arith.constant 0 : i32
    %104 = vector.broadcast %c0_i32_40 : i32 to vector<16x128xi32>
    %105 = arith.select %103, %33, %104 : vector<16x128xi1>, vector<16x128xi32>
    %cst_41 = arith.constant dense<0> : vector<16xi32>
    %106 = vector.multi_reduction <add>, %105, %cst_41 [1] : vector<16x128xi32> to vector<16xi32>
    %107 = vector.shape_cast %106 : vector<16xi32> to vector<16x1xi32>
    %108 = arith.select %88, %95, %107 : vector<16x1xi1>, vector<16x1xi32>
    %c1_i32_42 = arith.constant 1 : i32
    %109 = vector.broadcast %c1_i32_42 : i32 to vector<16x128xi32>
    %110 = arith.cmpi eq, %31, %109 : vector<16x128xi32>
    %111 = vector.shape_cast %89 : vector<16x1xf32> to vector<16x1xf32>
    %112 = vector.broadcast %111 : vector<16x1xf32> to vector<16x128xf32>
    %113 = arith.select %110, %112, %65 : vector<16x128xi1>, vector<16x128xf32>
    %c1_i32_43 = arith.constant 1 : i32
    %114 = vector.broadcast %c1_i32_43 : i32 to vector<16x128xi32>
    %115 = arith.cmpi eq, %31, %114 : vector<16x128xi32>
    %116 = vector.shape_cast %108 : vector<16x1xi32> to vector<16x1xi32>
    %117 = vector.broadcast %116 : vector<16x1xi32> to vector<16x128xi32>
    %118 = arith.select %115, %117, %70 : vector<16x128xi1>, vector<16x128xi32>
    %119 = vector.broadcast %95 : vector<16x1xi32> to vector<16x128xi32>
    %120 = arith.cmpi eq, %30, %119 : vector<16x128xi32>
    %121 = vector.broadcast %88 : vector<16x1xi1> to vector<16x128xi1>
    %122 = arith.andi %121, %120 : vector<16x128xi1>
    %cst_44 = arith.constant -1.000000e+30 : f32
    %123 = vector.broadcast %cst_44 : f32 to vector<16x128xf32>
    %124 = arith.select %122, %123, %76 : vector<16x128xi1>, vector<16x128xf32>
    %cst_45 = arith.constant dense<true> : vector<16x1xi1>
    %125 = arith.xori %88, %cst_45 : vector<16x1xi1>
    %126 = vector.broadcast %101 : vector<16x1xi32> to vector<16x128xi32>
    %127 = arith.cmpi eq, %31, %126 : vector<16x128xi32>
    %128 = vector.broadcast %125 : vector<16x1xi1> to vector<16x128xi1>
    %129 = arith.andi %128, %127 : vector<16x128xi1>
    %cst_46 = arith.constant -1.000000e+30 : f32
    %130 = vector.broadcast %cst_46 : f32 to vector<16x128xf32>
    %131 = arith.select %129, %130, %83 : vector<16x128xi1>, vector<16x128xf32>
    %cst_47 = arith.constant dense<0xFF800000> : vector<16xf32>
    %132 = vector.multi_reduction <maximumf>, %124, %cst_47 [1] : vector<16x128xf32> to vector<16xf32>
    %133 = vector.shape_cast %132 : vector<16xf32> to vector<16x1xf32>
    %cst_48 = arith.constant dense<0xFF800000> : vector<16xf32>
    %134 = vector.multi_reduction <maximumf>, %131, %cst_48 [1] : vector<16x128xf32> to vector<16xf32>
    %135 = vector.shape_cast %134 : vector<16xf32> to vector<16x1xf32>
    %136 = arith.cmpf ogt, %133, %135 : vector<16x1xf32>
    %137 = arith.maximumf %133, %135 : vector<16x1xf32>
    %138 = vector.broadcast %133 : vector<16x1xf32> to vector<16x128xf32>
    %139 = arith.cmpf oeq, %124, %138 : vector<16x128xf32>
    %c1073741824_i32_49 = arith.constant 1073741824 : i32
    %140 = vector.broadcast %c1073741824_i32_49 : i32 to vector<16x128xi32>
    %141 = arith.select %139, %30, %140 : vector<16x128xi1>, vector<16x128xi32>
    %cst_50 = arith.constant dense<2147483647> : vector<16xi32>
    %142 = vector.multi_reduction <minsi>, %141, %cst_50 [1] : vector<16x128xi32> to vector<16xi32>
    %143 = vector.shape_cast %142 : vector<16xi32> to vector<16x1xi32>
    %144 = vector.broadcast %135 : vector<16x1xf32> to vector<16x128xf32>
    %145 = arith.cmpf oeq, %131, %144 : vector<16x128xf32>
    %c1073741824_i32_51 = arith.constant 1073741824 : i32
    %146 = vector.broadcast %c1073741824_i32_51 : i32 to vector<16x128xi32>
    %147 = arith.select %145, %31, %146 : vector<16x128xi1>, vector<16x128xi32>
    %cst_52 = arith.constant dense<2147483647> : vector<16xi32>
    %148 = vector.multi_reduction <minsi>, %147, %cst_52 [1] : vector<16x128xi32> to vector<16xi32>
    %149 = vector.shape_cast %148 : vector<16xi32> to vector<16x1xi32>
    %150 = vector.broadcast %149 : vector<16x1xi32> to vector<16x128xi32>
    %151 = arith.cmpi eq, %31, %150 : vector<16x128xi32>
    %c0_i32_53 = arith.constant 0 : i32
    %152 = vector.broadcast %c0_i32_53 : i32 to vector<16x128xi32>
    %153 = arith.select %151, %33, %152 : vector<16x128xi1>, vector<16x128xi32>
    %cst_54 = arith.constant dense<0> : vector<16xi32>
    %154 = vector.multi_reduction <add>, %153, %cst_54 [1] : vector<16x128xi32> to vector<16xi32>
    %155 = vector.shape_cast %154 : vector<16xi32> to vector<16x1xi32>
    %156 = arith.select %136, %143, %155 : vector<16x1xi1>, vector<16x1xi32>
    %c2_i32 = arith.constant 2 : i32
    %157 = vector.broadcast %c2_i32 : i32 to vector<16x128xi32>
    %158 = arith.cmpi eq, %31, %157 : vector<16x128xi32>
    %159 = vector.shape_cast %137 : vector<16x1xf32> to vector<16x1xf32>
    %160 = vector.broadcast %159 : vector<16x1xf32> to vector<16x128xf32>
    %161 = arith.select %158, %160, %113 : vector<16x128xi1>, vector<16x128xf32>
    %c2_i32_55 = arith.constant 2 : i32
    %162 = vector.broadcast %c2_i32_55 : i32 to vector<16x128xi32>
    %163 = arith.cmpi eq, %31, %162 : vector<16x128xi32>
    %164 = vector.shape_cast %156 : vector<16x1xi32> to vector<16x1xi32>
    %165 = vector.broadcast %164 : vector<16x1xi32> to vector<16x128xi32>
    %166 = arith.select %163, %165, %118 : vector<16x128xi1>, vector<16x128xi32>
    %c0_56 = arith.constant 0 : index
    %c0_57 = arith.constant 0 : index
    %167 = vector.load %arg10[%c0_56, %c0_57] : memref<16x128xf32, #tpu.memory_space<vmem>>, vector<16x128xf32>
    tpu.vector_store %arg10[%c0_56, %c0_57], %161 {strides = array<i32>} : memref<16x128xf32, #tpu.memory_space<vmem>>, vector<16x128xf32>,
    %c0_58 = arith.constant 0 : index
    %c0_59 = arith.constant 0 : index
    %168 = vector.load %arg11[%c0_58, %c0_59] : memref<16x128xi32, #tpu.memory_space<vmem>>, vector<16x128xi32>
    tpu.vector_store %arg11[%c0_58, %c0_59], %166 {strides = array<i32>} : memref<16x128xi32, #tpu.memory_space<vmem>>, vector<16x128xi32>,
    %c0_i32_60 = arith.constant 0 : i32
    %169 = arith.cmpi eq, %arg1, %c0_i32_60 : i32
    %170 = arith.extui %169 : i1 to i32
    %c0_i32_61 = arith.constant 0 : i32
    %171 = arith.cmpi ne, %170, %c0_i32_61 : i32
    scf.if %171 {
      %c0_62 = arith.constant 0 : index
      %c0_63 = arith.constant 0 : index
      %172 = vector.load %arg10[%c0_62, %c0_63] : memref<16x128xf32, #tpu.memory_space<vmem>>, vector<16x128xf32>
      %c0_64 = arith.constant 0 : index
      %c0_65 = arith.constant 0 : index
      %c0_66 = arith.constant 0 : index
      %173 = vector.load %arg5[%c0_64, %c0_65, %c0_66] : memref<1x16x128xf32, #tpu.memory_space<vmem>>, vector<1x16x128xf32>
      %174 = vector.shape_cast %173 : vector<1x16x128xf32> to vector<16x128xf32>
      %175 = vector.shape_cast %172 : vector<16x128xf32> to vector<1x16x128xf32>
      tpu.vector_store %arg5[%c0_64, %c0_65, %c0_66], %175 {strides = array<i32>} : memref<1x16x128xf32, #tpu.memory_space<vmem>>, vector<1x16x128xf32>,
      %c0_67 = arith.constant 0 : index
      %c0_68 = arith.constant 0 : index
      %176 = vector.load %arg11[%c0_67, %c0_68] : memref<16x128xi32, #tpu.memory_space<vmem>>, vector<16x128xi32>
      %c0_69 = arith.constant 0 : index
      %c0_70 = arith.constant 0 : index
      %c0_71 = arith.constant 0 : index
      %177 = vector.load %arg6[%c0_69, %c0_70, %c0_71] : memref<1x16x128xi32, #tpu.memory_space<vmem>>, vector<1x16x128xi32>
      %178 = vector.shape_cast %177 : vector<1x16x128xi32> to vector<16x128xi32>
      %179 = vector.shape_cast %176 : vector<16x128xi32> to vector<1x16x128xi32>
      tpu.vector_store %arg6[%c0_69, %c0_70, %c0_71], %179 {strides = array<i32>} : memref<1x16x128xi32, #tpu.memory_space<vmem>>, vector<1x16x128xi32>,
      %c0_72 = arith.constant 0 : index
      %c0_73 = arith.constant 0 : index
      %180 = vector.load %arg8[%c0_72, %c0_73] : memref<16x1xf32, #tpu.memory_space<vmem>>, vector<16x1xf32>
      %c0_74 = arith.constant 0 : index
      %c0_75 = arith.constant 0 : index
      %181 = vector.load %arg9[%c0_74, %c0_75] : memref<16x1xf32, #tpu.memory_space<vmem>>, vector<16x1xf32>
      %182 = math.log %181 : vector<16x1xf32>
      %183 = arith.addf %180, %182 : vector<16x1xf32>
      %c0_76 = arith.constant 0 : index
      %c0_77 = arith.constant 0 : index
      %c0_78 = arith.constant 0 : index
      %184 = vector.load %arg7[%c0_76, %c0_77, %c0_78] : memref<1x16x1xf32, #tpu.memory_space<vmem>>, vector<1x16x1xf32>
      %185 = vector.shape_cast %184 : vector<1x16x1xf32> to vector<16x1xf32>
      %186 = vector.shape_cast %183 : vector<16x1xf32> to vector<1x16x1xf32>
      tpu.vector_store %arg7[%c0_76, %c0_77, %c0_78], %186 {strides = array<i32>} : memref<1x16x1xf32, #tpu.memory_space<vmem>>, vector<1x16x1xf32>,
    } else {
    }
    return
  }
  func.func @transform_0(%arg0: i32, %arg1: i32) -> (i32, i32) {
    %c0_i32 = arith.constant 0 : i32
    %c0_i32_0 = arith.constant 0 : i32
    %c0_i32_1 = arith.constant 0 : i32
    return %c0_i32, %c0_i32_0 : i32, i32
  }
  func.func @transform_1(%arg0: i32, %arg1: i32) -> (i32, i32) {
    %c1_i32 = arith.constant 1 : i32
    %0 = arith.muli %arg0, %c1_i32 : i32
    %1 = arith.addi %0, %arg1 : i32
    %c0_i32 = arith.constant 0 : i32
    %c0_i32_0 = arith.constant 0 : i32
    return %c0_i32, %1 : i32, i32
  }
  func.func @transform_2(%arg0: i32, %arg1: i32) -> (i32, i32) {
    %c1_i32 = arith.constant 1 : i32
    %0 = arith.muli %arg0, %c1_i32 : i32
    %1 = arith.addi %0, %arg1 : i32
    %c0_i32 = arith.constant 0 : i32
    %c0_i32_0 = arith.constant 0 : i32
    return %c0_i32, %1 : i32, i32
  }
  func.func @transform_3(%arg0: i32, %arg1: i32) -> (i32, i32, i32) {
    %c0_i32 = arith.constant 0 : i32
    %c0_i32_0 = arith.constant 0 : i32
    %c0_i32_1 = arith.constant 0 : i32
    return %arg0, %c0_i32, %c0_i32_0 : i32, i32, i32
  }
  func.func @transform_4(%arg0: i32, %arg1: i32) -> (i32, i32, i32) {
    %c0_i32 = arith.constant 0 : i32
    %c0_i32_0 = arith.constant 0 : i32
    %c0_i32_1 = arith.constant 0 : i32
    return %arg0, %c0_i32, %c0_i32_0 : i32, i32, i32
  }
  func.func @transform_5(%arg0: i32, %arg1: i32) -> (i32, i32, i32) {
    %c0_i32 = arith.constant 0 : i32
    %c0_i32_0 = arith.constant 0 : i32
    %c0_i32_1 = arith.constant 0 : i32
    return %arg0, %c0_i32, %c0_i32_0 : i32, i32, i32
  }
}

</mosaic_0001>

<llo_original>
// kernel: decode_first.2
$region0: #{decode_first.2}
  #allocation0 [shape = 'u32[]', space=smem, size = 0x4, offset = 0x4, fixed_abs, tag = 'smem constant byte address 0x4 - core index']
  #allocation1 [shape = 'u32[144,128]{1,0:T(1,128)}', space=vmem, size = 0x12000, scoped, tag = 'internal scratch']
  %s0 = inlined_call_operand.vmem [shape: bf16[2,8,128], index: 0, kind: input, shape index: {}]
  %s1 = inlined_call_operand.vmem [shape: bf16[2,128,128], index: 1, kind: input, shape index: {}]
  %s2 = inlined_call_operand.vmem [shape: f32[2,1,128], index: 2, kind: input, shape index: {}]
  %s3 = inlined_call_operand.vmem [shape: bf16[128,128], index: 3, kind: input, shape index: {}]
  %s4 = inlined_call_operand.vmem [shape: bf16[2,8,128], index: 4, kind: output, shape index: {}]
  %s5 = sld [smem:[#allocation0]]
  $region49: #{decode_first.2} parent=0
    _
  %s7 = ssub.s32 1, %s5
  %s8 = scalar_select 0, %s7, %s5
  loop: start=0, step=1, limit=4
  $region2: #{decode_first.2} parent=0 // loop_pre_header
    _
  $region3: #{decode_first.2} parent=0 // loop_header
    %s10 = sphi 0, %s14
    %p11 = scmp.ge.s32.totalorder %s10, 4
    %s20 = sphi 0, %s22
    %s23 = sphi 0, %s20
    %s24 = sphi 0, %s23
    %s40 = sphi 0, %s24
    %s46 = sphi 0, %s48
    %s49 = sphi 0, %s46
    %s50 = sphi 0, %s49
    %s66 = sphi 0, %s50
    %s72 = sphi 0, %s74
    %s75 = sphi 0, %s72
    %s76 = sphi 0, %s75
    %s92 = sphi 0, %s76
    %s96 = sphi 0, %s96
    %s98 = sphi 0, %s96
    %s99 = sphi 0, %s98
    %s113 = sphi 0, %s99
    %s119 = sphi 0, %s121
    %s122 = sphi 0, %s119
    %s123 = sphi 0, %s122
    %s139 = sphi 0, %s123
  $region4: #{decode_first.2} parent=0 // loop_header_branch
    %13 = sbr.rel (%p11) target = $region8
  $region5: #{decode_first.2} parent=0 // loop_body
    %s15 = ssub.s32 %s10, 1
    %s16 = ssub.s32 %s10, 2
    %s17 = sadd.s32 %s10, 1
    %s18 = ssub.s32 %s10, %s17
    %p19 = scmp.eq.s32.totalorder %s18, 0
    %s21 = sadd.s32 %s20, 1
    %s22 = scalar_select %p19, %s20, %s21
    %p25 = pneg %p19
    %p26 = scmp.eq.s32.totalorder %s10, 1
    %p27 = por %p25, %p26
    %p28 = scmp.ne.s32.totalorder %s20, %s23
    %p29 = scmp.eq.s32.totalorder %s10, 0
    %p30 = por %p28, %p29
    %p31 = scmp.ne.s32.totalorder %s20, %s23
    %p32 = scmp.eq.s32.totalorder %s15, 1
    %p33 = por %p31, %p32
    %p34 = scmp.ne.s32.totalorder %s23, %s24
    %p35 = scmp.eq.s32.totalorder %s15, 0
    %p36 = por %p34, %p35
    %p37 = scmp.ne.s32.totalorder %s23, %s24
    %p38 = scmp.eq.s32.totalorder %s16, 1
    %p39 = por %p37, %p38
    %p41 = scmp.ne.s32.totalorder %s24, %s40
    %p42 = scmp.eq.s32.totalorder %s16, 0
    %p43 = por %p41, %p42
    %s44 = ssub.s32 %s10, %s17
    %p45 = scmp.eq.s32.totalorder %s44, 0
    %s47 = sadd.s32 %s46, 1
    %s48 = scalar_select %p45, %s46, %s47
    %p51 = pneg %p45
    %p52 = scmp.eq.s32.totalorder %s10, 1
    %p53 = por %p51, %p52
    %p54 = scmp.ne.s32.totalorder %s46, %s49
    %p55 = scmp.eq.s32.totalorder %s10, 0
    %p56 = por %p54, %p55
    %p57 = scmp.ne.s32.totalorder %s46, %s49
    %p58 = scmp.eq.s32.totalorder %s15, 1
    %p59 = por %p57, %p58
    %p60 = scmp.ne.s32.totalorder %s49, %s50
    %p61 = scmp.eq.s32.totalorder %s15, 0
    %p62 = por %p60, %p61
    %p63 = scmp.ne.s32.totalorder %s49, %s50
    %p64 = scmp.eq.s32.totalorder %s16, 1
    %p65 = por %p63, %p64
    %p67 = scmp.ne.s32.totalorder %s50, %s66
    %p68 = scmp.eq.s32.totalorder %s16, 0
    %p69 = por %p67, %p68
    %s70 = ssub.s32 %s10, %s17
    %p71 = scmp.eq.s32.totalorder %s70, 0
    %s73 = sadd.s32 %s72, 1
    %s74 = scalar_select %p71, %s72, %s73
    %p77 = pneg %p71
    %p78 = scmp.eq.s32.totalorder %s10, 1
    %p79 = por %p77, %p78
    %p80 = scmp.ne.s32.totalorder %s72, %s75
    %p81 = scmp.eq.s32.totalorder %s10, 0
    %p82 = por %p80, %p81
    %p83 = scmp.ne.s32.totalorder %s72, %s75
    %p84 = scmp.eq.s32.totalorder %s15, 1
    %p85 = por %p83, %p84
    %p86 = scmp.ne.s32.totalorder %s75, %s76
    %p87 = scmp.eq.s32.totalorder %s15, 0
    %p88 = por %p86, %p87
    %p89 = scmp.ne.s32.totalorder %s75, %s76
    %p90 = scmp.eq.s32.totalorder %s16, 1
    %p91 = por %p89, %p90
    %p93 = scmp.ne.s32.totalorder %s76, %s92
    %p94 = scmp.eq.s32.totalorder %s16, 0
    %p95 = por %p93, %p94
    %s97 = sadd.s32 %s96, 1
    %p100 = scmp.eq.s32.totalorder %s10, 1
    %p101 = scmp.ne.s32.totalorder %s96, %s98
    %p102 = scmp.eq.s32.totalorder %s10, 0
    %p103 = por %p101, %p102
    %p104 = scmp.ne.s32.totalorder %s96, %s98
    %p105 = scmp.eq.s32.totalorder %s15, 1
    %p106 = por %p104, %p105
    %p107 = scmp.ne.s32.totalorder %s98, %s99
    %p108 = scmp.eq.s32.totalorder %s15, 0
    %p109 = por %p107, %p108
    %p110 = scmp.ne.s32.totalorder %s98, %s99
    %p111 = scmp.eq.s32.totalorder %s16, 1
    %p112 = por %p110, %p111
    %p114 = scmp.ne.s32.totalorder %s99, %s113
    %p115 = scmp.eq.s32.totalorder %s16, 0
    %p116 = por %p114, %p115
    %s117 = ssub.s32 %s10, %s17
    %p118 = scmp.eq.s32.totalorder %s117, 0
    %s120 = sadd.s32 %s119, 1
    %s121 = scalar_select %p118, %s119, %s120
    %p124 = pneg %p118
    %p125 = scmp.eq.s32.totalorder %s10, 1
    %p126 = por %p124, %p125
    %p127 = scmp.ne.s32.totalorder %s119, %s122
    %p128 = scmp.eq.s32.totalorder %s10, 0
    %p129 = por %p127, %p128
    %p130 = scmp.ne.s32.totalorder %s119, %s122
    %p131 = scmp.eq.s32.totalorder %s15, 1
    %p132 = por %p130, %p131
    %p133 = scmp.ne.s32.totalorder %s122, %s123
    %p134 = scmp.eq.s32.totalorder %s15, 0
    %p135 = por %p133, %p134
    %p136 = scmp.ne.s32.totalorder %s122, %s123
    %p137 = scmp.eq.s32.totalorder %s16, 1
    %p138 = por %p136, %p137
    %p140 = scmp.ne.s32.totalorder %s123, %s139
    %p141 = scmp.eq.s32.totalorder %s16, 0
    %p142 = por %p140, %p141
    %p143 = scmp.le.s32.totalorder 1, %s10
    %p144 = scmp.lt.s32.totalorder %s10, 3
    %p145 = pnand %p143, %p144
    %p146 = pneg %p145
    // Predicated region
    $region9: #{decode_first.2} parent=5 // pred_check
      _
    $region10: #{decode_first.2} parent=5 // pred_check_branch
      %148 = sbr.rel (%p145) target = $region12
    $region11: #{decode_first.2} parent=5 // pred_region
      %s149 = ssub.s32 %s10, 1
      // Predicated region
      $region13: #{decode_first.2} parent=11 // pred_check
        %p150 = pneg %p109
      $region14: #{decode_first.2} parent=11 // pred_check_branch
        %152 = sbr.rel (%p150) target = $region16
      $region15: #{decode_first.2} parent=11 // pred_region
        _
      $region16: #{decode_first.2} parent=11 // pred_fallthru
        _
    $region12: #{decode_first.2} parent=5 // pred_fallthru
      _
    %p153 = scmp.lt.s32.totalorder %s10, 2
    // Predicated region
    $region17: #{decode_first.2} parent=5 // pred_check
      %p154 = pneg %p153
    $region18: #{decode_first.2} parent=5 // pred_check_branch
      %156 = sbr.rel (%p154) target = $region20
    $region19: #{decode_first.2} parent=5 // pred_region
      // Predicated region
      $region21: #{decode_first.2} parent=19 // pred_check
        %p157 = pneg %p30
      $region22: #{decode_first.2} parent=19 // pred_check_branch
        %159 = sbr.rel (%p157) target = $region24
      $region23: #{decode_first.2} parent=19 // pred_region
        %p160 = scmp.lt.s32.totalorder %s10, 1
        %s161 = scalar_select %p160, %s10, 1
        %s162 = smul.addr %s161, 4
        %s163 = scalar_lea.vmem %s0, %s162
      $region24: #{decode_first.2} parent=19 // pred_fallthru
        _
      // Predicated region
      $region25: #{decode_first.2} parent=19 // pred_check
        %p164 = pneg %p56
      $region26: #{decode_first.2} parent=19 // pred_check_branch
        %166 = sbr.rel (%p164) target = $region28
      $region27: #{decode_first.2} parent=19 // pred_region
        %p167 = scmp.lt.s32.totalorder %s10, 1
        %s168 = scalar_select %p167, %s10, 1
        %s169 = smul.addr %s168, 16
        %s170 = smul.addr %s169, 4
        %s171 = scalar_lea.vmem %s1, %s170
      $region28: #{decode_first.2} parent=19 // pred_fallthru
        _
      // Predicated region
      $region29: #{decode_first.2} parent=19 // pred_check
        %p172 = pneg %p82
      $region30: #{decode_first.2} parent=19 // pred_check_branch
        %174 = sbr.rel (%p172) target = $region32
      $region31: #{decode_first.2} parent=19 // pred_region
        %p175 = scmp.lt.s32.totalorder %s10, 1
        %s176 = scalar_select %p175, %s10, 1
        %s177 = scalar_lea.vmem %s2, %s176
      $region32: #{decode_first.2} parent=19 // pred_fallthru
        _
    $region20: #{decode_first.2} parent=5 // pred_fallthru
      _
    %p178 = scmp.le.s32.totalorder 1, %s10
    %p179 = scmp.lt.s32.totalorder %s10, 3
    %p180 = pnand %p178, %p179
    %p181 = pneg %p180
    // Predicated region
    $region33: #{decode_first.2} parent=5 // pred_check
      _
    $region34: #{decode_first.2} parent=5 // pred_check_branch
      %183 = sbr.rel (%p180) target = $region36
    $region35: #{decode_first.2} parent=5 // pred_region
      %s184 = ssub.s32 %s10, 1
      %p185 = scmp.lt.s32.totalorder %s15, 1
      %s186 = scalar_select %p185, %s15, 1
      %s187 = smul.addr %s186, 4
      %s188 = scalar_lea.vmem %s0, %s187
      %p189 = pneg %p36
      %p190 = pneg %p33
      %p191 = scmp.lt.s32.totalorder %s15, 1
      %s192 = scalar_select %p191, %s15, 1
      %s193 = smul.addr %s192, 16
      %s194 = smul.addr %s193, 4
      %s195 = scalar_lea.vmem %s1, %s194
      %p196 = pneg %p62
      %p197 = pneg %p59
      %p198 = scmp.lt.s32.totalorder %s15, 1
      %s199 = scalar_select %p198, %s15, 1
      %s200 = scalar_lea.vmem %s2, %s199
      %p201 = pneg %p88
      %p202 = pneg %p85
      %p203 = pneg %p109
      %p204 = pneg %p106
      %p205 = pneg %p135
      %p206 = pneg %p132
      %p207 = scmp.lt.s32.totalorder %s15, 1
      %s208 = scalar_select %p207, %s15, 1
      %s209 = smul.addr %s208, 4
      %s210 = scalar_lea.vmem %s4, %s209
      %p211 = scmp.lt.s32.totalorder %s15, 1
      %s212 = scalar_select %p211, %s15, 1
      %s213 = smul.addr %s212, 4
      %s214 = scalar_lea.vmem %s0, %s213
      %p215 = scmp.lt.s32.totalorder %s15, 1
      %s216 = scalar_select %p215, %s15, 1
      %s217 = smul.addr %s216, 16
      %s218 = smul.addr %s217, 4
      %s219 = scalar_lea.vmem %s1, %s218
      %p220 = scmp.lt.s32.totalorder %s15, 1
      %s221 = scalar_select %p220, %s15, 1
      %s222 = scalar_lea.vmem %s2, %s221
      %p223 = scmp.lt.s32.totalorder %s15, 1
      %s224 = scalar_select %p223, %s15, 1
      %s225 = smul.addr %s224, 4
      %s226 = scalar_lea.vmem %s4, %s225
      %v228 = vld [vmem:[%s214] sm:$0xf]
      %v229 = vld [vmem:[%s219] sm:$0xf]
      %v230 = vld [vmem:[%s219 + $0x4] sm:$0xf]
      %v231 = vld [vmem:[%s219 + $0x8] sm:$0xf]
      %v232 = vld [vmem:[%s219 + $0xc] sm:$0xf]
      %v233 = vld [vmem:[%s219 + $0x10] sm:$0xf]
      %v234 = vld [vmem:[%s219 + $0x14] sm:$0xf]
      %v235 = vld [vmem:[%s219 + $0x18] sm:$0xf]
      %v236 = vld [vmem:[%s219 + $0x1c] sm:$0xf]
      %v237 = vld [vmem:[%s219 + $0x20] sm:$0xf]
      %v238 = vld [vmem:[%s219 + $0x24] sm:$0xf]
      %v239 = vld [vmem:[%s219 + $0x28] sm:$0xf]
      %v240 = vld [vmem:[%s219 + $0x2c] sm:$0xf]
      %v241 = vld [vmem:[%s219 + $0x30] sm:$0xf]
      %v242 = vld [vmem:[%s219 + $0x34] sm:$0xf]
      %v243 = vld [vmem:[%s219 + $0x38] sm:$0xf]
      %v244 = vld [vmem:[%s219 + $0x3c] sm:$0xf]
      %v261 = vunpack.c.l.b16 %v229
      %v262 = vunpack.c.l.b16 %v230
      %v263 = vunpack.c.l.b16 %v231
      %v264 = vunpack.c.l.b16 %v232
      %v265 = vunpack.c.l.b16 %v233
      %v266 = vunpack.c.l.b16 %v234
      %v267 = vunpack.c.l.b16 %v235
      %v268 = vunpack.c.l.b16 %v236
      %v269 = vunpack.c.l.b16 %v237
      %v270 = vunpack.c.l.b16 %v238
      %v271 = vunpack.c.l.b16 %v239
      %v272 = vunpack.c.l.b16 %v240
      %v273 = vunpack.c.l.b16 %v241
      %v274 = vunpack.c.l.b16 %v242
      %v275 = vunpack.c.l.b16 %v243
      %v276 = vunpack.c.l.b16 %v244
      %v277 = vpack.c.b16 %v262, %v261
      %v278 = vpack.c.b16 %v264, %v263
      %v279 = vpack.c.b16 %v266, %v265
      %v280 = vpack.c.b16 %v268, %v267
      %v281 = vpack.c.b16 %v270, %v269
      %v282 = vpack.c.b16 %v272, %v271
      %v283 = vpack.c.b16 %v274, %v273
      %v284 = vpack.c.b16 %v276, %v275
      %293 = vmatprep.subr.bf16.mxu0 0
      %294 = vmatpush1.bf16.xpose.msra.mxu0 %v277
      %295 = vmatprep.subr.bf16.mxu0 0
      %296 = vmatpush1.bf16.xpose.msra.mxu0 %v278
      %297 = vmatprep.subr.bf16.mxu0 0
      %298 = vmatpush1.bf16.xpose.msra.mxu0 %v279
      %299 = vmatprep.subr.bf16.mxu0 0
      %300 = vmatpush1.bf16.xpose.msra.mxu0 %v280
      %301 = vmatprep.subr.bf16.mxu0 0
      %302 = vmatpush1.bf16.xpose.msra.mxu0 %v281
      %303 = vmatprep.subr.bf16.mxu0 0
      %304 = vmatpush1.bf16.xpose.msra.mxu0 %v282
      %305 = vmatprep.subr.bf16.mxu0 0
      %306 = vmatpush1.bf16.xpose.msra.mxu0 %v283
      %307 = vmatprep.subr.bf16.mxu0 0
      %308 = vmatpush1.bf16.xpose.msra.mxu0 %v284
      %309 = vmatprep.subr.bf16.mxu0 0
      %310 = vmatpush1.bf16.xpose.msra.mxu0 0
      %311 = vmatprep.subr.bf16.mxu0 0
      %312 = vmatpush1.bf16.xpose.msra.mxu0 0
      %313 = vmatprep.subr.bf16.mxu0 0
      %314 = vmatpush1.bf16.xpose.msra.mxu0 0
      %315 = vmatprep.subr.bf16.mxu0 0
      %316 = vmatpush1.bf16.xpose.msra.mxu0 0
      %317 = vmatprep.subr.bf16.mxu0 0
      %318 = vmatpush1.bf16.xpose.msra.mxu0 0
      %319 = vmatprep.subr.bf16.mxu0 0
      %320 = vmatpush1.bf16.xpose.msra.mxu0 0
      %321 = vmatprep.subr.bf16.mxu0 0
      %322 = vmatpush1.bf16.xpose.msra.mxu0 0
      %323 = vmatprep.subr.bf16.mxu0 0
      %324 = vmatpush1.bf16.xpose.msra.mxu0 0
      %325 = vmatprep.mubr.bf16.mxu0 0
      %326 = vmatmul.mubr.bf16.gmra.mrb[0].mxu0 %v228
      %v327 = vpop.f32.mrb[0].mxu0
      %v328 = vadd.f32 0.0, %v327
      %v329 = vpop.f32.mrb[0].mxu0
      %v330 = vpop.f32.mrb[0].mxu0
      %v331 = vpop.f32.mrb[0].mxu0
      %332 = vdwg.mxu0
      %v333 = vmul.f32 %v328, 0.17677669
      %v334 = vld [vmem:[%s222] sm:$0x1]
      %v336 = vlaneseq
      %v337 = vshrl.u32 %v336, 7
      %v338 = vsub.s32 0, %v337
      %v339 = vrot.slane %v334, %v338
      %v341 = vadd.f32 %v333, %v339
      %342 = vmax.xlane.f32.xlu0 %v341
      %v343 = vpop.xlane.xlu0 %342
      %v344 = vsub.f32 %v341, %v343
      %v345 = vmul.f32 %v344, 1.442695
      %v346 = vpow.pop %v345
      %347 = vadd.xlane.f32.xlu0 %v346
      %v348 = vpop.xlane.xlu0 %347
      %v349 = vrcp.pop %v348
      %v350 = vmul.f32 %v346, %v349
      %v351 = vpack.c.bf16 %v350, %v350
      %352 = vmatprep.subr.bf16.mxu0 0
      %353 = vmatpush1.bf16.msra.mxu0 %v277
      %354 = vmatprep.subr.bf16.mxu0 0
      %355 = vmatpush1.bf16.msra.mxu0 %v278
      %356 = vmatprep.subr.bf16.mxu0 0
      %357 = vmatpush1.bf16.msra.mxu0 %v279
      %358 = vmatprep.subr.bf16.mxu0 0
      %359 = vmatpush1.bf16.msra.mxu0 %v280
      %360 = vmatprep.subr.bf16.mxu0 0
      %361 = vmatpush1.bf16.msra.mxu0 %v281
      %362 = vmatprep.subr.bf16.mxu0 0
      %363 = vmatpush1.bf16.msra.mxu0 %v282
      %364 = vmatprep.subr.bf16.mxu0 0
      %365 = vmatpush1.bf16.msra.mxu0 %v283
      %366 = vmatprep.subr.bf16.mxu0 0
      %367 = vmatpush1.bf16.msra.mxu0 %v284
      %368 = vmatprep.subr.bf16.mxu0 0
      %369 = vmatpush1.bf16.msra.mxu0 0
      %370 = vmatprep.subr.bf16.mxu0 0
      %371 = vmatpush1.bf16.msra.mxu0 0
      %372 = vmatprep.subr.bf16.mxu0 0
      %373 = vmatpush1.bf16.msra.mxu0 0
      %374 = vmatprep.subr.bf16.mxu0 0
      %375 = vmatpush1.bf16.msra.mxu0 0
      %376 = vmatprep.subr.bf16.mxu0 0
      %377 = vmatpush1.bf16.msra.mxu0 0
      %378 = vmatprep.subr.bf16.mxu0 0
      %379 = vmatpush1.bf16.msra.mxu0 0
      %380 = vmatprep.subr.bf16.mxu0 0
      %381 = vmatpush1.bf16.msra.mxu0 0
      %382 = vmatprep.subr.bf16.mxu0 0
      %383 = vmatpush1.bf16.msra.mxu0 0
      %384 = vmatprep.mubr.bf16.mxu0 0
      %385 = vmatmul.mubr.bf16.gmra.mrb[0].mxu0 %v351
      %v386 = vpop.f32.mrb[0].mxu0
      %v387 = vadd.f32 0.0, %v386
      %v388 = vpop.f32.mrb[0].mxu0
      %v389 = vpop.f32.mrb[0].mxu0
      %v390 = vpop.f32.mrb[0].mxu0
      %391 = vdwg.mxu0
      %v392 = vpack.c.bf16 %v387, %v387
      %v393 = vld [vmem:[%s3] sm:$0xf]
      %v394 = vld [vmem:[%s3 + $0x4] sm:$0xf]
      %v395 = vld [vmem:[%s3 + $0x8] sm:$0xf]
      %v396 = vld [vmem:[%s3 + $0xc] sm:$0xf]
      %v397 = vld [vmem:[%s3 + $0x10] sm:$0xf]
      %v398 = vld [vmem:[%s3 + $0x14] sm:$0xf]
      %v399 = vld [vmem:[%s3 + $0x18] sm:$0xf]
      %v400 = vld [vmem:[%s3 + $0x1c] sm:$0xf]
      %v401 = vld [vmem:[%s3 + $0x20] sm:$0xf]
      %v402 = vld [vmem:[%s3 + $0x24] sm:$0xf]
      %v403 = vld [vmem:[%s3 + $0x28] sm:$0xf]
      %v404 = vld [vmem:[%s3 + $0x2c] sm:$0xf]
      %v405 = vld [vmem:[%s3 + $0x30] sm:$0xf]
      %v406 = vld [vmem:[%s3 + $0x34] sm:$0xf]
      %v407 = vld [vmem:[%s3 + $0x38] sm:$0xf]
      %v408 = vld [vmem:[%s3 + $0x3c] sm:$0xf]
      %v425 = vunpack.c.l.b16 %v393
      %v426 = vunpack.c.l.b16 %v394
      %v427 = vunpack.c.l.b16 %v395
      %v428 = vunpack.c.l.b16 %v396
      %v429 = vunpack.c.l.b16 %v397
      %v430 = vunpack.c.l.b16 %v398
      %v431 = vunpack.c.l.b16 %v399
      %v432 = vunpack.c.l.b16 %v400
      %v433 = vunpack.c.l.b16 %v401
      %v434 = vunpack.c.l.b16 %v402
      %v435 = vunpack.c.l.b16 %v403
      %v436 = vunpack.c.l.b16 %v404
      %v437 = vunpack.c.l.b16 %v405
      %v438 = vunpack.c.l.b16 %v406
      %v439 = vunpack.c.l.b16 %v407
      %v440 = vunpack.c.l.b16 %v408
      %v441 = vpack.c.b16 %v426, %v425
      %v442 = vpack.c.b16 %v428, %v427
      %v443 = vpack.c.b16 %v430, %v429
      %v444 = vpack.c.b16 %v432, %v431
      %v445 = vpack.c.b16 %v434, %v433
      %v446 = vpack.c.b16 %v436, %v435
      %v447 = vpack.c.b16 %v438, %v437
      %v448 = vpack.c.b16 %v440, %v439
      %457 = vmatprep.subr.bf16.mxu0 0
      %458 = vmatpush1.bf16.msra.mxu0 %v441
      %459 = vmatprep.subr.bf16.mxu0 0
      %460 = vmatpush1.bf16.msra.mxu0 %v442
      %461 = vmatprep.subr.bf16.mxu0 0
      %462 = vmatpush1.bf16.msra.mxu0 %v443
      %463 = vmatprep.subr.bf16.mxu0 0
      %464 = vmatpush1.bf16.msra.mxu0 %v444
      %465 = vmatprep.subr.bf16.mxu0 0
      %466 = vmatpush1.bf16.msra.mxu0 %v445
      %467 = vmatprep.subr.bf16.mxu0 0
      %468 = vmatpush1.bf16.msra.mxu0 %v446
      %469 = vmatprep.subr.bf16.mxu0 0
      %470 = vmatpush1.bf16.msra.mxu0 %v447
      %471 = vmatprep.subr.bf16.mxu0 0
      %472 = vmatpush1.bf16.msra.mxu0 %v448
      %473 = vmatprep.subr.bf16.mxu0 0
      %474 = vmatpush1.bf16.msra.mxu0 0
      %475 = vmatprep.subr.bf16.mxu0 0
      %476 = vmatpush1.bf16.msra.mxu0 0
      %477 = vmatprep.subr.bf16.mxu0 0
      %478 = vmatpush1.bf16.msra.mxu0 0
      %479 = vmatprep.subr.bf16.mxu0 0
      %480 = vmatpush1.bf16.msra.mxu0 0
      %481 = vmatprep.subr.bf16.mxu0 0
      %482 = vmatpush1.bf16.msra.mxu0 0
      %483 = vmatprep.subr.bf16.mxu0 0
      %484 = vmatpush1.bf16.msra.mxu0 0
      %485 = vmatprep.subr.bf16.mxu0 0
      %486 = vmatpush1.bf16.msra.mxu0 0
      %487 = vmatprep.subr.bf16.mxu0 0
      %488 = vmatpush1.bf16.msra.mxu0 0
      %489 = vmatprep.mubr.bf16.mxu0 0
      %490 = vmatmul.mubr.bf16.gmra.mrb[0].mxu0 %v392
      %v491 = vpop.f32.mrb[0].mxu0
      %v492 = vadd.f32 0.0, %v491
      %v493 = vpop.f32.mrb[0].mxu0
      %v494 = vpop.f32.mrb[0].mxu0
      %v495 = vpop.f32.mrb[0].mxu0
      %496 = vdwg.mxu0
      %v497 = vtanh.pop %v492
      %v498 = vpack.c.bf16 %v497, %v497
      %499 = vst [vmem:[%s226] sm:$0xf] %v498
      %p500 = scmp.lt.s32.totalorder %s15, 1
      %s501 = scalar_select %p500, %s15, 1
      %s502 = smul.addr %s501, 4
      %s503 = scalar_lea.vmem %s4, %s502
      // Predicated region
      $region37: #{decode_first.2} parent=35 // pred_check
        %p504 = pneg %p132
      $region38: #{decode_first.2} parent=35 // pred_check_branch
        %506 = sbr.rel (%p504) target = $region40
      $region39: #{decode_first.2} parent=35 // pred_region
        _
      $region40: #{decode_first.2} parent=35 // pred_fallthru
        _
    $region36: #{decode_first.2} parent=5 // pred_fallthru
      _
    %p507 = scmp.le.s32.totalorder 2, %s10
    // Predicated region
    $region41: #{decode_first.2} parent=5 // pred_check
      %p508 = pneg %p507
    $region42: #{decode_first.2} parent=5 // pred_check_branch
      %510 = sbr.rel (%p508) target = $region44
    $region43: #{decode_first.2} parent=5 // pred_region
      %s511 = ssub.s32 %s10, 2
      // Predicated region
      $region45: #{decode_first.2} parent=43 // pred_check
        %p512 = pneg %p138
      $region46: #{decode_first.2} parent=43 // pred_check_branch
        %514 = sbr.rel (%p512) target = $region48
      $region47: #{decode_first.2} parent=43 // pred_region
        %p515 = scmp.lt.s32.totalorder %s16, 1
        %s516 = scalar_select %p515, %s16, 1
        %s517 = smul.addr %s516, 4
        %s518 = scalar_lea.vmem %s4, %s517
      $region48: #{decode_first.2} parent=43 // pred_fallthru
        _
    $region44: #{decode_first.2} parent=5 // pred_fallthru
      _
  $region6: #{decode_first.2} parent=0 // loop_footer
    %s14 = sadd.s32 1, %s10
  $region7: #{decode_first.2} parent=0 // loop_footer_branch
    %9 = sbr.rel target = $region3
  $region8: #{decode_first.2} parent=0 // loop_exit
    _

// kernel: decode_first.3
$region0: #{decode_first.3}
  #allocation0 [shape = 'u32[]', space=smem, size = 0x4, offset = 0x4, fixed_abs, tag = 'smem constant byte address 0x4 - core index']
  #allocation1 [shape = 'u32[144,128]{1,0:T(1,128)}', space=vmem, size = 0x12000, scoped, tag = 'internal scratch']
  #allocation2 [shape = 'f32[16,1]{1,0:T(8,128)}', space=vmem, size = 0x2000, scoped, tag = 'scratch operand']
  #allocation3 [shape = 'f32[16,1]{1,0:T(8,128)}', space=vmem, size = 0x2000, scoped, tag = 'scratch operand']
  #allocation4 [shape = 'f32[16,128]{1,0:T(8,128)}', space=vmem, size = 0x2000, scoped, tag = 'scratch operand']
  #allocation5 [shape = 's32[16,128]{1,0:T(8,128)}', space=vmem, size = 0x2000, scoped, tag = 'scratch operand']
  %s0 = inlined_call_operand.vmem [shape: bf16[16,128], index: 0, kind: input, shape index: {}]
  %s1 = inlined_call_operand.vmem [shape: bf16[128,128], index: 1, kind: input, shape index: {}]
  %s2 = inlined_call_operand.vmem [shape: f32[1,128], index: 2, kind: input, shape index: {}]
  %s3 = inlined_call_operand.vmem [shape: f32[1,16,128], index: 3, kind: output, shape index: {0}]
  %s4 = inlined_call_operand.vmem [shape: s32[1,16,128], index: 4, kind: output, shape index: {1}]
  %s5 = inlined_call_operand.vmem [shape: f32[1,16,1], index: 5, kind: output, shape index: {2}]
  %6 = xla_tuple %s3, %s4, %s5
  %s7 = sld [smem:[#allocation0]]
  $region46: #{decode_first.3} parent=0
    _
  %s9 = ssub.s32 1, %s7
  %s10 = scalar_select 0, %s9, %s7
  // Predicated region
  $region2: #{decode_first.3} parent=0 // pred_check
    _
  $region3: #{decode_first.3} parent=0 // pred_check_branch
    %12 = sbr.rel (0) target = $region5
  $region4: #{decode_first.3} parent=0 // pred_region
    _
  $region5: #{decode_first.3} parent=0 // pred_fallthru
    _
  // Predicated region
  $region6: #{decode_first.3} parent=0 // pred_check
    _
  $region7: #{decode_first.3} parent=0 // pred_check_branch
    %14 = sbr.rel (0) target = $region9
  $region8: #{decode_first.3} parent=0 // pred_region
    %s15 = sadd.s32 0, 0
    %p16 = scmp.lt.s32.totalorder %s15, 0
    %s17 = scalar_select %p16, %s15, 0
    %s18 = smul.addr %s17, 4
    %s19 = scalar_lea.vmem %s1, %s18
    %s20 = sadd.s32 0, 0
  $region9: #{decode_first.3} parent=0 // pred_fallthru
    _
  // Predicated region
  $region10: #{decode_first.3} parent=0 // pred_check
    _
  $region11: #{decode_first.3} parent=0 // pred_check_branch
    %22 = sbr.rel (0) target = $region13
  $region12: #{decode_first.3} parent=0 // pred_region
    %s23 = sadd.s32 0, 0
    %p24 = scmp.lt.s32.totalorder %s23, 0
    %s25 = scalar_select %p24, %s23, 0
    %s26 = scalar_lea.vmem %s2, %s25
    %s27 = sadd.s32 0, 0
  $region13: #{decode_first.3} parent=0 // pred_fallthru
    _
  %s28 = sadd.s32 0, 0
  %p29 = scmp.lt.s32.totalorder %s28, 0
  %s30 = scalar_select %p29, %s28, 0
  %s31 = smul.addr %s30, 4
  %s32 = scalar_lea.vmem %s1, %s31
  %s33 = sadd.s32 0, 0
  %p34 = scmp.lt.s32.totalorder %s33, 0
  %s35 = scalar_select %p34, %s33, 0
  %s36 = scalar_lea.vmem %s2, %s35
  %s37 = sadd.s32 0, 0
  %p38 = scmp.lt.s32.totalorder %s37, 0
  %s39 = scalar_select %p38, %s37, 0
  %s40 = smul.addr %s39, 4
  %s41 = scalar_lea.vmem %s1, %s40
  %s42 = sadd.s32 0, 0
  %s43 = sadd.s32 0, 0
  %p44 = scmp.lt.s32.totalorder %s43, 0
  %s45 = scalar_select %p44, %s43, 0
  %s46 = scalar_lea.vmem %s2, %s45
  %s47 = sadd.s32 0, 0
  %p49 = scmp.eq.s32.totalorder 0, 0
  // Predicated region
  $region14: #{decode_first.3} parent=0 // pred_check
    %p50 = pneg %p49
  $region15: #{decode_first.3} parent=0 // pred_check_branch
    %52 = sbr.rel (%p50) target = $region17
  $region16: #{decode_first.3} parent=0 // pred_region
    %vm53 = vcmask 7168
    %54 = vst.msk [vmem:[#allocation2] sm:$0xff] %vm53, -1e+30
    %55 = vst.msk [vmem:[#allocation2 + $0x8] sm:$0xff] %vm53, -1e+30
    %56 = vst.msk [vmem:[#allocation3] sm:$0xff] %vm53, 0.0
    %57 = vst.msk [vmem:[#allocation3 + $0x8] sm:$0xff] %vm53, 0.0
    %58 = vst [vmem:[#allocation4] sm:$0xff] -1e+30
    %59 = vst [vmem:[#allocation4 + $0x8] sm:$0xff] -1e+30
    %60 = vst [vmem:[#allocation5] sm:$0xff] 0
    %61 = vst [vmem:[#allocation5 + $0x8] sm:$0xff] 0
  $region17: #{decode_first.3} parent=0 // pred_fallthru
    _
  %v62 = vld [vmem:[%s0] sm:$0xf]
  %v63 = vld [vmem:[%s0 + $0x4] sm:$0xf]
  %v64 = vld [vmem:[%s41] sm:$0xf]
  %v65 = vld [vmem:[%s41 + $0x4] sm:$0xf]
  %v66 = vld [vmem:[%s41 + $0x8] sm:$0xf]
  %v67 = vld [vmem:[%s41 + $0xc] sm:$0xf]
  %v68 = vld [vmem:[%s41 + $0x10] sm:$0xf]
  %v69 = vld [vmem:[%s41 + $0x14] sm:$0xf]
  %v70 = vld [vmem:[%s41 + $0x18] sm:$0xf]
  %v71 = vld [vmem:[%s41 + $0x1c] sm:$0xf]
  %v72 = vld [vmem:[%s41 + $0x20] sm:$0xf]
  %v73 = vld [vmem:[%s41 + $0x24] sm:$0xf]
  %v74 = vld [vmem:[%s41 + $0x28] sm:$0xf]
  %v75 = vld [vmem:[%s41 + $0x2c] sm:$0xf]
  %v76 = vld [vmem:[%s41 + $0x30] sm:$0xf]
  %v77 = vld [vmem:[%s41 + $0x34] sm:$0xf]
  %v78 = vld [vmem:[%s41 + $0x38] sm:$0xf]
  %v79 = vld [vmem:[%s41 + $0x3c] sm:$0xf]
  %v80 = vld [vmem:[%s46] sm:$0x1]
  %v82 = vlaneseq
  %v83 = vshrl.u32 %v82, 7
  %v84 = vsub.s32 0, %v83
  %v85 = vrot.slane %v80, %v84
  %v89 = vunpack.c.l.b16 %v62
  %v90 = vunpack.c.l.b16 %v63
  %v91 = vpack.c.b16 %v90, %v89
  %v109 = vunpack.c.l.b16 %v64
  %v110 = vunpack.c.l.b16 %v65
  %v111 = vunpack.c.l.b16 %v66
  %v112 = vunpack.c.l.b16 %v67
  %v113 = vunpack.c.l.b16 %v68
  %v114 = vunpack.c.l.b16 %v69
  %v115 = vunpack.c.l.b16 %v70
  %v116 = vunpack.c.l.b16 %v71
  %v117 = vunpack.c.l.b16 %v72
  %v118 = vunpack.c.l.b16 %v73
  %v119 = vunpack.c.l.b16 %v74
  %v120 = vunpack.c.l.b16 %v75
  %v121 = vunpack.c.l.b16 %v76
  %v122 = vunpack.c.l.b16 %v77
  %v123 = vunpack.c.l.b16 %v78
  %v124 = vunpack.c.l.b16 %v79
  %v125 = vpack.c.b16 %v110, %v109
  %v126 = vpack.c.b16 %v112, %v111
  %v127 = vpack.c.b16 %v114, %v113
  %v128 = vpack.c.b16 %v116, %v115
  %v129 = vpack.c.b16 %v118, %v117
  %v130 = vpack.c.b16 %v120, %v119
  %v131 = vpack.c.b16 %v122, %v121
  %v132 = vpack.c.b16 %v124, %v123
  %141 = vmatprep.subr.bf16.mxu0 0
  %142 = vmatpush1.bf16.msra.mxu0 %v125
  %143 = vmatprep.subr.bf16.mxu0 0
  %144 = vmatpush1.bf16.msra.mxu0 %v126
  %145 = vmatprep.subr.bf16.mxu0 0
  %146 = vmatpush1.bf16.msra.mxu0 %v127
  %147 = vmatprep.subr.bf16.mxu0 0
  %148 = vmatpush1.bf16.msra.mxu0 %v128
  %149 = vmatprep.subr.bf16.mxu0 0
  %150 = vmatpush1.bf16.msra.mxu0 %v129
  %151 = vmatprep.subr.bf16.mxu0 0
  %152 = vmatpush1.bf16.msra.mxu0 %v130
  %153 = vmatprep.subr.bf16.mxu0 0
  %154 = vmatpush1.bf16.msra.mxu0 %v131
  %155 = vmatprep.subr.bf16.mxu0 0
  %156 = vmatpush1.bf16.msra.mxu0 %v132
  %157 = vmatprep.subr.bf16.mxu0 0
  %158 = vmatpush1.bf16.msra.mxu0 0
  %159 = vmatprep.subr.bf16.mxu0 0
  %160 = vmatpush1.bf16.msra.mxu0 0
  %161 = vmatprep.subr.bf16.mxu0 0
  %162 = vmatpush1.bf16.msra.mxu0 0
  %163 = vmatprep.subr.bf16.mxu0 0
  %164 = vmatpush1.bf16.msra.mxu0 0
  %165 = vmatprep.subr.bf16.mxu0 0
  %166 = vmatpush1.bf16.msra.mxu0 0
  %167 = vmatprep.subr.bf16.mxu0 0
  %168 = vmatpush1.bf16.msra.mxu0 0
  %169 = vmatprep.subr.bf16.mxu0 0
  %170 = vmatpush1.bf16.msra.mxu0 0
  %171 = vmatprep.subr.bf16.mxu0 0
  %172 = vmatpush1.bf16.msra.mxu0 0
  %173 = vmatprep.mubr.bf16.mxu0 0
  %174 = vmatmul.mubr.bf16.gmra.mrb[0].mxu0 %v91
  %v175 = vpop.f32.mrb[0].mxu0
  %v176 = vadd.f32 %v85, %v175
  %v177 = vpop.f32.mrb[0].mxu0
  %v178 = vpop.f32.mrb[0].mxu0
  %v179 = vadd.f32 %v85, %v178
  %v180 = vpop.f32.mrb[0].mxu0
  %181 = vdwg.mxu0
  %v182 = vld [vmem:[#allocation2] sm:$0xff]
  %v183 = vld [vmem:[#allocation2 + $0x8] sm:$0xff]
  %184 = vmax.xlane.f32.xlu0 %v176
  %v185 = vpop.xlane.xlu0 %184
  %186 = vmax.xlane.f32.xlu0 %v179
  %v187 = vpop.xlane.xlu0 %186
  %v188 = vmax.f32 %v182, %v185
  %v189 = vmax.f32 %v183, %v187
  %v190 = vld [vmem:[#allocation3] sm:$0xff]
  %v191 = vld [vmem:[#allocation3 + $0x8] sm:$0xff]
  %v192 = vsub.f32 %v182, %v188
  %v193 = vsub.f32 %v183, %v189
  %v194 = vmul.f32 %v192, 1.442695
  %v195 = vpow.pop %v194
  %v196 = vmul.f32 %v193, 1.442695
  %v197 = vpow.pop %v196
  %v198 = vmul.f32 %v190, %v195
  %v199 = vmul.f32 %v191, %v197
  %201 = vset.pattern.permute.xlu0 0
  %202 = vperm.xlu0 %201, %v188
  %v203 = vpop.permute.xlu0 %202
  %206 = vset.pattern.permute.xlu0 0
  %207 = vperm.xlu0 %206, %v189
  %v208 = vpop.permute.xlu0 %207
  %v210 = vsub.f32 %v176, %v203
  %v211 = vsub.f32 %v179, %v208
  %v212 = vmul.f32 %v210, 1.442695
  %v213 = vpow.pop %v212
  %v214 = vmul.f32 %v211, 1.442695
  %v215 = vpow.pop %v214
  %216 = vadd.xlane.f32.xlu0 %v213
  %v217 = vpop.xlane.xlu0 %216
  %218 = vadd.xlane.f32.xlu0 %v215
  %v219 = vpop.xlane.xlu0 %218
  %v220 = vadd.f32 %v198, %v217
  %v221 = vadd.f32 %v199, %v219
  %vm222 = vcmask 7168
  %223 = vst.msk [vmem:[#allocation3] sm:$0xff] %vm222, %v220
  %224 = vst.msk [vmem:[#allocation3 + $0x8] sm:$0xff] %vm222, %v221
  %225 = vst.msk [vmem:[#allocation2] sm:$0xff] %vm222, %v188
  %226 = vst.msk [vmem:[#allocation2 + $0x8] sm:$0xff] %vm222, %v189
  %v227 = vlaneseq
  %v228 = vand.u32 %v227, 127
  %s229 = sadd.s32 0, 0
  %s230 = smul.u32 %s229, 128
  %v231 = vstv %s230
  %v232 = vadd.s32 %v228, %v231
  %v233 = vld [vmem:[#allocation4] sm:$0xff]
  %v234 = vld [vmem:[#allocation4 + $0x8] sm:$0xff]
  %v235 = vld [vmem:[#allocation5] sm:$0xff]
  %v236 = vld [vmem:[#allocation5 + $0x8] sm:$0xff]
  %237 = vmax.xlane.f32.xlu0 %v233
  %v238 = vpop.xlane.xlu0 %237
  %239 = vmax.xlane.f32.xlu0 %v234
  %v240 = vpop.xlane.xlu0 %239
  %vm241 = vcmp.gt.f32.partialorder %v185, %v238
  %vm242 = vcmp.gt.f32.partialorder %v187, %v240
  %v243 = vmax.f32 %v185, %v238
  %v244 = vmax.f32 %v187, %v240
  %vm245 = vcmp.eq.f32.partialorder %v176, %v185
  %vm246 = vcmp.eq.f32.partialorder %v179, %v187
  %v247 = vsel %vm245, %v232, 1073741824
  %v248 = vsel %vm246, %v232, 1073741824
  %v249 = vand.u32 %v247, 65535
  %v250 = vshra.s32 %v247, 16
  %v251 = vcvt.s32.f32 %v249
  %v252 = vcvt.s32.f32 %v250
  %253 = vmin.xlane.f32.xlu0 %v252
  %v254 = vpop.xlane.xlu0 %253
  %vm255 = vcmp.eq.f32.partialorder %v252, %v254
  %v256 = vsel %vm255, %v251, inf
  %257 = vmin.xlane.f32.xlu0 %v256
  %v258 = vpop.xlane.xlu0 %257
  %v259 = vcvt.f32.s32 %v258
  %v260 = vcvt.f32.s32 %v254
  %v261 = vshll.u32 %v260, 16
  %v262 = vadd.s32 %v261, %v259
  %v263 = vand.u32 %v248, 65535
  %v264 = vshra.s32 %v248, 16
  %v265 = vcvt.s32.f32 %v263
  %v266 = vcvt.s32.f32 %v264
  %267 = vmin.xlane.f32.xlu0 %v266
  %v268 = vpop.xlane.xlu0 %267
  %vm269 = vcmp.eq.f32.partialorder %v266, %v268
  %v270 = vsel %vm269, %v265, inf
  %271 = vmin.xlane.f32.xlu0 %v270
  %v272 = vpop.xlane.xlu0 %271
  %v273 = vcvt.f32.s32 %v272
  %v274 = vcvt.f32.s32 %v268
  %v275 = vshll.u32 %v274, 16
  %v276 = vadd.s32 %v275, %v273
  %vm277 = vcmp.eq.f32.partialorder %v233, %v238
  %vm278 = vcmp.eq.f32.partialorder %v234, %v240
  %v279 = vsel %vm277, %v228, 1073741824
  %v280 = vsel %vm278, %v228, 1073741824
  %v281 = vand.u32 %v279, 65535
  %v282 = vshra.s32 %v279, 16
  %v283 = vcvt.s32.f32 %v281
  %v284 = vcvt.s32.f32 %v282
  %285 = vmin.xlane.f32.xlu0 %v284
  %v286 = vpop.xlane.xlu0 %285
  %vm287 = vcmp.eq.f32.partialorder %v284, %v286
  %v288 = vsel %vm287, %v283, inf
  %289 = vmin.xlane.f32.xlu0 %v288
  %v290 = vpop.xlane.xlu0 %289
  %v291 = vcvt.f32.s32 %v290
  %v292 = vcvt.f32.s32 %v286
  %v293 = vshll.u32 %v292, 16
  %v294 = vadd.s32 %v293, %v291
  %v295 = vand.u32 %v280, 65535
  %v296 = vshra.s32 %v280, 16
  %v297 = vcvt.s32.f32 %v295
  %v298 = vcvt.s32.f32 %v296
  %299 = vmin.xlane.f32.xlu0 %v298
  %v300 = vpop.xlane.xlu0 %299
  %vm301 = vcmp.eq.f32.partialorder %v298, %v300
  %v302 = vsel %vm301, %v297, inf
  %303 = vmin.xlane.f32.xlu0 %v302
  %v304 = vpop.xlane.xlu0 %303
  %v305 = vcvt.f32.s32 %v304
  %v306 = vcvt.f32.s32 %v300
  %v307 = vshll.u32 %v306, 16
  %v308 = vadd.s32 %v307, %v305
  %vm309 = vcmp.eq.s32.totalorder %v228, %v294
  %vm310 = vcmp.eq.s32.totalorder %v228, %v308
  %v311 = vsel %vm309, %v235, 0
  %v312 = vsel %vm310, %v236, 0
  %v313 = vand.u32 %v311, 65535
  %v314 = vshrl.u32 %v311, 16
  %v315 = vcvt.s32.f32 %v313
  %v316 = vcvt.s32.f32 %v314
  %317 = vadd.xlane.f32.xlu0 %v315
  %v318 = vpop.xlane.xlu0 %317
  %319 = vadd.xlane.f32.xlu0 %v316
  %v320 = vpop.xlane.xlu0 %319
  %v321 = vcvt.f32.s32 %v318
  %v322 = vcvt.f32.s32 %v320
  %v323 = vshll.u32 %v322, 16
  %v324 = vadd.s32 %v323, %v321
  %v325 = vand.u32 %v312, 65535
  %v326 = vshrl.u32 %v312, 16
  %v327 = vcvt.s32.f32 %v325
  %v328 = vcvt.s32.f32 %v326
  %329 = vadd.xlane.f32.xlu0 %v327
  %v330 = vpop.xlane.xlu0 %329
  %331 = vadd.xlane.f32.xlu0 %v328
  %v332 = vpop.xlane.xlu0 %331
  %v333 = vcvt.f32.s32 %v330
  %v334 = vcvt.f32.s32 %v332
  %v335 = vshll.u32 %v334, 16
  %v336 = vadd.s32 %v335, %v333
  %v337 = vsel %vm241, %v262, %v324
  %v338 = vsel %vm242, %v276, %v336
  %vm339 = vcmp.eq.s32.totalorder %v228, 0
  %v340 = vsel %vm339, %v243, -1e+30
  %v341 = vsel %vm339, %v244, -1e+30
  %v342 = vsel %vm339, %v337, 0
  %v343 = vsel %vm339, %v338, 0
  %vm344 = vcmp.eq.s32.totalorder %v232, %v262
  %vm345 = vcmp.eq.s32.totalorder %v232, %v276
  %v346 = vsel %vm241, 1, 0
  %v347 = vsel %vm242, 1, 0
  %vm348 = vcmp.eq.s32.totalorder %v346, 1
  %vm349 = vcmp.eq.s32.totalorder %v347, 1
  %vm350 = vmand %vm348, %vm344
  %vm351 = vmand %vm349, %vm345
  %v352 = vsel %vm350, -1e+30, %v176
  %v353 = vsel %vm351, -1e+30, %v179
  %vm354 = vmxor %vm241, 1
  %vm355 = vmxor %vm242, 1
  %v356 = vsel %vm354, 1, 0
  %v357 = vsel %vm355, 1, 0
  %vm358 = vcmp.eq.s32.totalorder %v356, 1
  %vm359 = vcmp.eq.s32.totalorder %v357, 1
  %vm360 = vmand %vm358, %vm309
  %vm361 = vmand %vm359, %vm310
  %v362 = vsel %vm360, -1e+30, %v233
  %v363 = vsel %vm361, -1e+30, %v234
  %364 = vmax.xlane.f32.xlu0 %v352
  %v365 = vpop.xlane.xlu0 %364
  %366 = vmax.xlane.f32.xlu0 %v353
  %v367 = vpop.xlane.xlu0 %366
  %368 = vmax.xlane.f32.xlu0 %v362
  %v369 = vpop.xlane.xlu0 %368
  %370 = vmax.xlane.f32.xlu0 %v363
  %v371 = vpop.xlane.xlu0 %370
  %vm372 = vcmp.gt.f32.partialorder %v365, %v369
  %vm373 = vcmp.gt.f32.partialorder %v367, %v371
  %v374 = vmax.f32 %v365, %v369
  %v375 = vmax.f32 %v367, %v371
  %vm376 = vcmp.eq.f32.partialorder %v352, %v365
  %vm377 = vcmp.eq.f32.partialorder %v353, %v367
  %v378 = vsel %vm376, %v232, 1073741824
  %v379 = vsel %vm377, %v232, 1073741824
  %v380 = vand.u32 %v378, 65535
  %v381 = vshra.s32 %v378, 16
  %v382 = vcvt.s32.f32 %v380
  %v383 = vcvt.s32.f32 %v381
  %384 = vmin.xlane.f32.xlu0 %v383
  %v385 = vpop.xlane.xlu0 %384
  %vm386 = vcmp.eq.f32.partialorder %v383, %v385
  %v387 = vsel %vm386, %v382, inf
  %388 = vmin.xlane.f32.xlu0 %v387
  %v389 = vpop.xlane.xlu0 %388
  %v390 = vcvt.f32.s32 %v389
  %v391 = vcvt.f32.s32 %v385
  %v392 = vshll.u32 %v391, 16
  %v393 = vadd.s32 %v392, %v390
  %v394 = vand.u32 %v379, 65535
  %v395 = vshra.s32 %v379, 16
  %v396 = vcvt.s32.f32 %v394
  %v397 = vcvt.s32.f32 %v395
  %398 = vmin.xlane.f32.xlu0 %v397
  %v399 = vpop.xlane.xlu0 %398
  %vm400 = vcmp.eq.f32.partialorder %v397, %v399
  %v401 = vsel %vm400, %v396, inf
  %402 = vmin.xlane.f32.xlu0 %v401
  %v403 = vpop.xlane.xlu0 %402
  %v404 = vcvt.f32.s32 %v403
  %v405 = vcvt.f32.s32 %v399
  %v406 = vshll.u32 %v405, 16
  %v407 = vadd.s32 %v406, %v404
  %vm408 = vcmp.eq.f32.partialorder %v362, %v369
  %vm409 = vcmp.eq.f32.partialorder %v363, %v371
  %v410 = vsel %vm408, %v228, 1073741824
  %v411 = vsel %vm409, %v228, 1073741824
  %v412 = vand.u32 %v410, 65535
  %v413 = vshra.s32 %v410, 16
  %v414 = vcvt.s32.f32 %v412
  %v415 = vcvt.s32.f32 %v413
  %416 = vmin.xlane.f32.xlu0 %v415
  %v417 = vpop.xlane.xlu0 %416
  %vm418 = vcmp.eq.f32.partialorder %v415, %v417
  %v419 = vsel %vm418, %v414, inf
  %420 = vmin.xlane.f32.xlu0 %v419
  %v421 = vpop.xlane.xlu0 %420
  %v422 = vcvt.f32.s32 %v421
  %v423 = vcvt.f32.s32 %v417
  %v424 = vshll.u32 %v423, 16
  %v425 = vadd.s32 %v424, %v422
  %v426 = vand.u32 %v411, 65535
  %v427 = vshra.s32 %v411, 16
  %v428 = vcvt.s32.f32 %v426
  %v429 = vcvt.s32.f32 %v427
  %430 = vmin.xlane.f32.xlu0 %v429
  %v431 = vpop.xlane.xlu0 %430
  %vm432 = vcmp.eq.f32.partialorder %v429, %v431
  %v433 = vsel %vm432, %v428, inf
  %434 = vmin.xlane.f32.xlu0 %v433
  %v435 = vpop.xlane.xlu0 %434
  %v436 = vcvt.f32.s32 %v435
  %v437 = vcvt.f32.s32 %v431
  %v438 = vshll.u32 %v437, 16
  %v439 = vadd.s32 %v438, %v436
  %vm440 = vcmp.eq.s32.totalorder %v228, %v425
  %vm441 = vcmp.eq.s32.totalorder %v228, %v439
  %v442 = vsel %vm440, %v235, 0
  %v443 = vsel %vm441, %v236, 0
  %v444 = vand.u32 %v442, 65535
  %v445 = vshrl.u32 %v442, 16
  %v446 = vcvt.s32.f32 %v444
  %v447 = vcvt.s32.f32 %v445
  %448 = vadd.xlane.f32.xlu0 %v446
  %v449 = vpop.xlane.xlu0 %448
  %450 = vadd.xlane.f32.xlu0 %v447
  %v451 = vpop.xlane.xlu0 %450
  %v452 = vcvt.f32.s32 %v449
  %v453 = vcvt.f32.s32 %v451
  %v454 = vshll.u32 %v453, 16
  %v455 = vadd.s32 %v454, %v452
  %v456 = vand.u32 %v443, 65535
  %v457 = vshrl.u32 %v443, 16
  %v458 = vcvt.s32.f32 %v456
  %v459 = vcvt.s32.f32 %v457
  %460 = vadd.xlane.f32.xlu0 %v458
  %v461 = vpop.xlane.xlu0 %460
  %462 = vadd.xlane.f32.xlu0 %v459
  %v463 = vpop.xlane.xlu0 %462
  %v464 = vcvt.f32.s32 %v461
  %v465 = vcvt.f32.s32 %v463
  %v466 = vshll.u32 %v465, 16
  %v467 = vadd.s32 %v466, %v464
  %v468 = vsel %vm372, %v393, %v455
  %v469 = vsel %vm373, %v407, %v467
  %vm470 = vcmp.eq.s32.totalorder %v228, 1
  %v471 = vsel %vm470, %v374, %v340
  %v472 = vsel %vm470, %v375, %v341
  %v473 = vsel %vm470, %v468, %v342
  %v474 = vsel %vm470, %v469, %v343
  %vm475 = vcmp.eq.s32.totalorder %v232, %v393
  %vm476 = vcmp.eq.s32.totalorder %v232, %v407
  %v477 = vsel %vm372, 1, 0
  %v478 = vsel %vm373, 1, 0
  %vm479 = vcmp.eq.s32.totalorder %v477, 1
  %vm480 = vcmp.eq.s32.totalorder %v478, 1
  %vm481 = vmand %vm479, %vm475
  %vm482 = vmand %vm480, %vm476
  %v483 = vsel %vm481, -1e+30, %v352
  %v484 = vsel %vm482, -1e+30, %v353
  %vm485 = vmxor %vm372, 1
  %vm486 = vmxor %vm373, 1
  %v487 = vsel %vm485, 1, 0
  %v488 = vsel %vm486, 1, 0
  %vm489 = vcmp.eq.s32.totalorder %v487, 1
  %vm490 = vcmp.eq.s32.totalorder %v488, 1
  %vm491 = vmand %vm489, %vm440
  %vm492 = vmand %vm490, %vm441
  %v493 = vsel %vm491, -1e+30, %v362
  %v494 = vsel %vm492, -1e+30, %v363
  %495 = vmax.xlane.f32.xlu0 %v483
  %v496 = vpop.xlane.xlu0 %495
  %497 = vmax.xlane.f32.xlu0 %v484
  %v498 = vpop.xlane.xlu0 %497
  %499 = vmax.xlane.f32.xlu0 %v493
  %v500 = vpop.xlane.xlu0 %499
  %501 = vmax.xlane.f32.xlu0 %v494
  %v502 = vpop.xlane.xlu0 %501
  %vm503 = vcmp.gt.f32.partialorder %v496, %v500
  %vm504 = vcmp.gt.f32.partialorder %v498, %v502
  %v505 = vmax.f32 %v496, %v500
  %v506 = vmax.f32 %v498, %v502
  %vm507 = vcmp.eq.f32.partialorder %v483, %v496
  %vm508 = vcmp.eq.f32.partialorder %v484, %v498
  %v509 = vsel %vm507, %v232, 1073741824
  %v510 = vsel %vm508, %v232, 1073741824
  %v511 = vand.u32 %v509, 65535
  %v512 = vshra.s32 %v509, 16
  %v513 = vcvt.s32.f32 %v511
  %v514 = vcvt.s32.f32 %v512
  %515 = vmin.xlane.f32.xlu0 %v514
  %v516 = vpop.xlane.xlu0 %515
  %vm517 = vcmp.eq.f32.partialorder %v514, %v516
  %v518 = vsel %vm517, %v513, inf
  %519 = vmin.xlane.f32.xlu0 %v518
  %v520 = vpop.xlane.xlu0 %519
  %v521 = vcvt.f32.s32 %v520
  %v522 = vcvt.f32.s32 %v516
  %v523 = vshll.u32 %v522, 16
  %v524 = vadd.s32 %v523, %v521
  %v525 = vand.u32 %v510, 65535
  %v526 = vshra.s32 %v510, 16
  %v527 = vcvt.s32.f32 %v525
  %v528 = vcvt.s32.f32 %v526
  %529 = vmin.xlane.f32.xlu0 %v528
  %v530 = vpop.xlane.xlu0 %529
  %vm531 = vcmp.eq.f32.partialorder %v528, %v530
  %v532 = vsel %vm531, %v527, inf
  %533 = vmin.xlane.f32.xlu0 %v532
  %v534 = vpop.xlane.xlu0 %533
  %v535 = vcvt.f32.s32 %v534
  %v536 = vcvt.f32.s32 %v530
  %v537 = vshll.u32 %v536, 16
  %v538 = vadd.s32 %v537, %v535
  %vm539 = vcmp.eq.f32.partialorder %v493, %v500
  %vm540 = vcmp.eq.f32.partialorder %v494, %v502
  %v541 = vsel %vm539, %v228, 1073741824
  %v542 = vsel %vm540, %v228, 1073741824
  %v543 = vand.u32 %v541, 65535
  %v544 = vshra.s32 %v541, 16
  %v545 = vcvt.s32.f32 %v543
  %v546 = vcvt.s32.f32 %v544
  %547 = vmin.xlane.f32.xlu0 %v546
  %v548 = vpop.xlane.xlu0 %547
  %vm549 = vcmp.eq.f32.partialorder %v546, %v548
  %v550 = vsel %vm549, %v545, inf
  %551 = vmin.xlane.f32.xlu0 %v550
  %v552 = vpop.xlane.xlu0 %551
  %v553 = vcvt.f32.s32 %v552
  %v554 = vcvt.f32.s32 %v548
  %v555 = vshll.u32 %v554, 16
  %v556 = vadd.s32 %v555, %v553
  %v557 = vand.u32 %v542, 65535
  %v558 = vshra.s32 %v542, 16
  %v559 = vcvt.s32.f32 %v557
  %v560 = vcvt.s32.f32 %v558
  %561 = vmin.xlane.f32.xlu0 %v560
  %v562 = vpop.xlane.xlu0 %561
  %vm563 = vcmp.eq.f32.partialorder %v560, %v562
  %v564 = vsel %vm563, %v559, inf
  %565 = vmin.xlane.f32.xlu0 %v564
  %v566 = vpop.xlane.xlu0 %565
  %v567 = vcvt.f32.s32 %v566
  %v568 = vcvt.f32.s32 %v562
  %v569 = vshll.u32 %v568, 16
  %v570 = vadd.s32 %v569, %v567
  %vm571 = vcmp.eq.s32.totalorder %v228, %v556
  %vm572 = vcmp.eq.s32.totalorder %v228, %v570
  %v573 = vsel %vm571, %v235, 0
  %v574 = vsel %vm572, %v236, 0
  %v575 = vand.u32 %v573, 65535
  %v576 = vshrl.u32 %v573, 16
  %v577 = vcvt.s32.f32 %v575
  %v578 = vcvt.s32.f32 %v576
  %579 = vadd.xlane.f32.xlu0 %v577
  %v580 = vpop.xlane.xlu0 %579
  %581 = vadd.xlane.f32.xlu0 %v578
  %v582 = vpop.xlane.xlu0 %581
  %v583 = vcvt.f32.s32 %v580
  %v584 = vcvt.f32.s32 %v582
  %v585 = vshll.u32 %v584, 16
  %v586 = vadd.s32 %v585, %v583
  %v587 = vand.u32 %v574, 65535
  %v588 = vshrl.u32 %v574, 16
  %v589 = vcvt.s32.f32 %v587
  %v590 = vcvt.s32.f32 %v588
  %591 = vadd.xlane.f32.xlu0 %v589
  %v592 = vpop.xlane.xlu0 %591
  %593 = vadd.xlane.f32.xlu0 %v590
  %v594 = vpop.xlane.xlu0 %593
  %v595 = vcvt.f32.s32 %v592
  %v596 = vcvt.f32.s32 %v594
  %v597 = vshll.u32 %v596, 16
  %v598 = vadd.s32 %v597, %v595
  %v599 = vsel %vm503, %v524, %v586
  %v600 = vsel %vm504, %v538, %v598
  %vm601 = vcmp.eq.s32.totalorder %v228, 2
  %v602 = vsel %vm601, %v505, %v471
  %v603 = vsel %vm601, %v506, %v472
  %v604 = vsel %vm601, %v599, %v473
  %v605 = vsel %vm601, %v600, %v474
  %606 = vst [vmem:[#allocation4] sm:$0xff] %v602
  %607 = vst [vmem:[#allocation4 + $0x8] sm:$0xff] %v603
  %608 = vst [vmem:[#allocation5] sm:$0xff] %v604
  %609 = vst [vmem:[#allocation5 + $0x8] sm:$0xff] %v605
  // Predicated region
  $region18: #{decode_first.3} parent=0 // pred_check
    %p610 = pneg %p49
  $region19: #{decode_first.3} parent=0 // pred_check_branch
    %612 = sbr.rel (%p610) target = $region21
  $region20: #{decode_first.3} parent=0 // pred_region
    %v613 = vld [vmem:[#allocation4] sm:$0xff]
    %v614 = vld [vmem:[#allocation4 + $0x8] sm:$0xff]
    %615 = vst [vmem:[%s3] sm:$0xff] %v613
    %616 = vst [vmem:[%s3 + $0x8] sm:$0xff] %v614
    %v617 = vld [vmem:[#allocation5] sm:$0xff]
    %v618 = vld [vmem:[#allocation5 + $0x8] sm:$0xff]
    %619 = vst [vmem:[%s4] sm:$0xff] %v617
    %620 = vst [vmem:[%s4 + $0x8] sm:$0xff] %v618
    %v621 = vld [vmem:[#allocation2] sm:$0xff]
    %v622 = vld [vmem:[#allocation2 + $0x8] sm:$0xff]
    %v623 = vld [vmem:[#allocation3] sm:$0xff]
    %v624 = vld [vmem:[#allocation3 + $0x8] sm:$0xff]
    %v625 = vlog2.pop %v623
    %v626 = vmul.f32 %v625, 0.6931472
    %v627 = vlog2.pop %v624
    %v628 = vmul.f32 %v627, 0.6931472
    %v629 = vadd.f32 %v621, %v626
    %v630 = vadd.f32 %v622, %v628
    %631 = vst.msk [vmem:[%s5] sm:$0xff] %vm222, %v629
    %632 = vst.msk [vmem:[%s5 + $0x8] sm:$0xff] %vm222, %v630
  $region21: #{decode_first.3} parent=0 // pred_fallthru
    _
  // Predicated region
  $region22: #{decode_first.3} parent=0 // pred_check
    _
  $region23: #{decode_first.3} parent=0 // pred_check_branch
    %634 = sbr.rel (0) target = $region25
  $region24: #{decode_first.3} parent=0 // pred_region
    _
  $region25: #{decode_first.3} parent=0 // pred_fallthru
    _
  // Predicated region
  $region26: #{decode_first.3} parent=0 // pred_check
    _
  $region27: #{decode_first.3} parent=0 // pred_check_branch
    %636 = sbr.rel (0) target = $region29
  $region28: #{decode_first.3} parent=0 // pred_region
    _
  $region29: #{decode_first.3} parent=0 // pred_fallthru
    _
  // Predicated region
  $region30: #{decode_first.3} parent=0 // pred_check
    _
  $region31: #{decode_first.3} parent=0 // pred_check_branch
    %638 = sbr.rel (0) target = $region33
  $region32: #{decode_first.3} parent=0 // pred_region
    _
  $region33: #{decode_first.3} parent=0 // pred_fallthru
    _
  // Predicated region
  $region34: #{decode_first.3} parent=0 // pred_check
    _
  $region35: #{decode_first.3} parent=0 // pred_check_branch
    %640 = sbr.rel (0) target = $region37
  $region36: #{decode_first.3} parent=0 // pred_region
    _
  $region37: #{decode_first.3} parent=0 // pred_fallthru
    _
  // Predicated region
  $region38: #{decode_first.3} parent=0 // pred_check
    _
  $region39: #{decode_first.3} parent=0 // pred_check_branch
    %642 = sbr.rel (0) target = $region41
  $region40: #{decode_first.3} parent=0 // pred_region
    _
  $region41: #{decode_first.3} parent=0 // pred_fallthru
    _
  // Predicated region
  $region42: #{decode_first.3} parent=0 // pred_check
    _
  $region43: #{decode_first.3} parent=0 // pred_check_branch
    %644 = sbr.rel (0) target = $region45
  $region44: #{decode_first.3} parent=0 // pred_region
    _
  $region45: #{decode_first.3} parent=0 // pred_fallthru
    _

</llo_original>
